<compile_context>
chip_gen: v6e
topology: v6e:2x2x1
jax: 0.10.0
libtpu: 0.0.40
codegen_flags: <defaults>
</compile_context>

<pallas_src>
import jax
import jax.numpy as jnp
from jax import lax
from jax.experimental import pallas as pl
from jax.experimental.pallas import tpu as pltpu

_LANES = 128


# ----------------------------------------------------------------------------
# Kernels
# ----------------------------------------------------------------------------
def _cost_kernel_packed(sq_ref, sr_ref, s_ref, a_ref, o_ref):
    """Lane-dense path.

    s_ref: (tile_p, 128*d)   a_ref: (tile_p, 128*a)   o_ref: (tile_p, 128)
    sq_ref: (128*d, 128), sr_ref: (128*a, 128) constant selection matrices
    with exp(q)/exp(r) folded in; each output lane c gets the weighted sum of
    its own d (resp. a) feature lanes.  Row-wise independent -> padded tail
    rows cannot pollute valid rows.
    """
    s = s_ref[...].astype(jnp.float32)
    a = a_ref[...].astype(jnp.float32)
    o_ref[...] = (
        jnp.dot(s * s, sq_ref[...],
                preferred_element_type=jnp.float32,
                precision=lax.Precision.HIGHEST)
        + jnp.dot(a * a, sr_ref[...],
                  preferred_element_type=jnp.float32,
                  precision=lax.Precision.HIGHEST)
    )


def _cost_kernel_rowwise(qe_ref, re_ref, s_ref, a_ref, o_ref):
    """Fallback (feature-on-lane) path for N not a multiple of 128."""
    s = s_ref[...].astype(jnp.float32)
    a = a_ref[...].astype(jnp.float32)
    o_ref[...] = (
        jnp.sum(s * s * qe_ref[...], axis=-1, keepdims=True)
        + jnp.sum(a * a * re_ref[...], axis=-1, keepdims=True)
    )


def _lqr_act_kernel(kT_ref, kvec_ref, g_ref, u_ref):
    """u = clip(-g0 @ K[0]^T + k[0], -1, 1) for a tile of the batch."""
    g = g_ref[...].astype(jnp.float32)
    u = kvec_ref[...] - jnp.dot(g, kT_ref[...],
                                preferred_element_type=jnp.float32,
                                precision=lax.Precision.HIGHEST)
    u_ref[...] = jnp.clip(u, -1.0, 1.0)


# ----------------------------------------------------------------------------
# Wrappers
# ----------------------------------------------------------------------------
def _selection_matrix(diag_exp, lanes=_LANES):
    """(lanes*d, lanes) with S[l, c] = diag_exp[l % d] if l // d == c else 0."""
    d = diag_exp.shape[0]
    l = jnp.arange(lanes * d)
    sel = (l[:, None] // d) == jnp.arange(lanes)[None, :]
    return jnp.where(sel, diag_exp[l % d][:, None], 0.0).astype(jnp.float32)


def _quadratic_cost_packed(states, actions, q_exp, r_exp, *, tile_rows):
    N, d = states.shape
    a_dim = actions.shape[-1]
    P = N // _LANES                       # packed rows; each holds 128 samples
    ls, la = _LANES * d, _LANES * a_dim

    # Free row-major reshapes: the lane axis is now fully dense.
    s_pk = states.reshape(P, ls)
    a_pk = actions.reshape(P, la)
    sq = _selection_matrix(q_exp)         # (128*d, 128), resident in VMEM
    sr = _selection_matrix(r_exp)         # (128*a, 128), resident in VMEM

    # Per-tile VMEM (f32, no lane padding): tile_p*(ls+la+128)*4 B, x2 buffers.
    # Default tile_p = 256 (32768 samples) -> ~1.8 MiB: safe on v5e/v6e/v7x.
    tile_p = max(1, min(P, tile_rows // _LANES))
    if tile_p < P:
        tile_p = max(8, (tile_p // 8) * 8)        # (8, 128) block rule
    grid = (pl.cdiv(P, tile_p),)

    itemsize = states.dtype.itemsize
    cost = pl.CostEstimate(
        flops=int(2 * N * _LANES * (d + a_dim) + 2 * N * (d + a_dim)),
        transcendentals=0,
        bytes_accessed=int(N * (d + a_dim) * itemsize + N * 4
                           + (ls + la) * _LANES * 4),
    )

    out = pl.pallas_call(
        _cost_kernel_packed,
        out_shape=jax.ShapeDtypeStruct((P, _LANES), jnp.float32),
        grid=grid,
        in_specs=[
            pl.BlockSpec((ls, _LANES), lambda i: (0, 0)),     # Sq (resident)
            pl.BlockSpec((la, _LANES), lambda i: (0, 0)),     # Sr (resident)
            pl.BlockSpec((tile_p, ls), lambda i: (i, 0)),
            pl.BlockSpec((tile_p, la), lambda i: (i, 0)),
        ],
        out_specs=pl.BlockSpec((tile_p, _LANES), lambda i: (i, 0)),
        compiler_params=pltpu.CompilerParams(
            dimension_semantics=("parallel",)),
        cost_estimate=cost,
    )(sq, sr, s_pk, a_pk)
    return out.reshape(N)


def _quadratic_cost_rowwise(states, actions, q_exp, r_exp):
    N, d = states.shape
    a_dim = actions.shape[-1]
    # Feature-on-lane layout: VMEM pads the lane axis to 128 lanes, so the
    # physical footprint is ~3 * tile_n * 512 B * 2 buffers.  tile_n=2048 ->
    # ~6.3 MiB: fits the 16 MiB scoped VMEM default on v5e (and v6e/v7x).
    tile_n = N if N <= 2048 else 2048
    grid = (pl.cdiv(N, tile_n),)

    itemsize = states.dtype.itemsize
    cost = pl.CostEstimate(
        flops=int(3 * N * (d + a_dim) + N),
        transcendentals=0,
        bytes_accessed=int(N * (d + a_dim) * itemsize + N * 4 + (d + a_dim) * 4),
    )

    out = pl.pallas_call(
        _cost_kernel_rowwise,
        out_shape=jax.ShapeDtypeStruct((N, 1), jnp.float32),
        grid=grid,
        in_specs=[
            pl.BlockSpec((1, d), lambda i: (0, 0)),           # exp(q) resident
            pl.BlockSpec((1, a_dim), lambda i: (0, 0)),       # exp(r) resident
            pl.BlockSpec((tile_n, d), lambda i: (i, 0)),
            pl.BlockSpec((tile_n, a_dim), lambda i: (i, 0)),
        ],
        out_specs=pl.BlockSpec((tile_n, 1), lambda i: (i, 0)),
        compiler_params=pltpu.CompilerParams(
            dimension_semantics=("parallel",)),
        cost_estimate=cost,
    )(q_exp.reshape(1, d), r_exp.reshape(1, a_dim), states, actions)
    return out.reshape(N)


def quadratic_cost(states, actions, q_diag_log, r_diag_log, *, tile_rows=32 * 1024):
    """diag(S Q S^T) + diag(A R A^T), Q = diag(exp q), R = diag(exp r).

    states: (B, T, d), actions: (B, T, a) in any float dtype -> (B*T,) float32.
    """
    B, T, d = states.shape
    a_dim = actions.shape[-1]
    N = B * T
    q_exp = jnp.exp(q_diag_log.astype(jnp.float32)).reshape(d)
    r_exp = jnp.exp(r_diag_log.astype(jnp.float32)).reshape(a_dim)
    if N % _LANES == 0:
        return _quadratic_cost_packed(states.reshape(N, d),
                                      actions.reshape(N, a_dim),
                                      q_exp, r_exp, tile_rows=tile_rows)
    return _quadratic_cost_rowwise(states.reshape(N, d),
                                   actions.reshape(N, a_dim), q_exp, r_exp)


def _solve_lqr_K0(A, Bm, q_diag_log, r_diag_log, horizon):
    """Riccati backward recursion (goal-free branch); returns K[0]."""
    Q = jnp.diag(jnp.exp(q_diag_log.astype(jnp.float32)))
    R = jnp.diag(jnp.exp(r_diag_log.astype(jnp.float32)))
    A = A.astype(jnp.float32)
    Bm = Bm.astype(jnp.float32)
    V = Q
    K0 = None
    for _ in range(horizon):
        Vuu_inv_Bt = jnp.linalg.solve(Bm.T @ V @ Bm + R, Bm.T)
        K0 = Vuu_inv_Bt @ V @ A
        A_BK = A - Bm @ K0
        V = A.T @ V @ A_BK + Q
    return K0


def lqr_act(g0, K0, k0, *, tile_b=1024):
    """Pallas kernel for KoopmanLQR.forward: clip(-K[0] g0 + k[0], -1, 1)."""
    nb, kdim = g0.shape
    u_dim = K0.shape[0]
    tile = nb if nb <= tile_b else tile_b
    grid = (pl.cdiv(nb, tile),)
    return pl.pallas_call(
        _lqr_act_kernel,
        out_shape=jax.ShapeDtypeStruct((nb, u_dim), jnp.float32),
        grid=grid,
        in_specs=[
            pl.BlockSpec((kdim, u_dim), lambda i: (0, 0)),    # K[0]^T resident
            pl.BlockSpec((1, u_dim), lambda i: (0, 0)),       # k[0] resident
            pl.BlockSpec((tile, kdim), lambda i: (i, 0)),
        ],
        out_specs=pl.BlockSpec((tile, u_dim), lambda i: (i, 0)),
        compiler_params=pltpu.CompilerParams(
            dimension_semantics=("parallel",)),
    )(K0.T.astype(jnp.float32), k0.astype(jnp.float32), g0)


def koopman_lqr_forward(g0, A, Bm, q_diag_log, r_diag_log, horizon):
    K0 = _solve_lqr_K0(A, Bm, q_diag_log, r_diag_log, horizon)
    k0 = jnp.zeros((1, Bm.shape[-1]), jnp.float32)   # g_goal is None -> k == 0
    return lqr_act(g0, K0, k0)


# ----------------------------------------------------------------------------
# References (pure elementwise f32 — independent of TPU matmul precision)
# ----------------------------------------------------------------------------
def quadratic_cost_ref(states, actions, q_diag_log, r_diag_log):
    N = states.shape[0] * states.shape[1]
    s = states.reshape(N, -1).astype(jnp.float32)
    a = actions.reshape(N, -1).astype(jnp.float32)
    qe = jnp.exp(q_diag_log.astype(jnp.float32))
    re = jnp.exp(r_diag_log.astype(jnp.float32))
    return (s * s * qe).sum(-1) + (a * a * re).sum(-1)


if __name__ == "__main__":
    key = jax.random.PRNGKey(0)
    keys = jax.random.split(key, 11)
    kdim, u_dim, horizon = 4, 2, 8          # koopman_dim, action_dim, horizon

    q_diag_log = 0.5 * jax.random.normal(keys[0], (kdim,), jnp.float32)
    r_diag_log = 0.5 * jax.random.normal(keys[1], (u_dim,), jnp.float32)

    # 1) Q/R cost, lane-dense packed path (N % 128 == 0), single grid step.
    B1, T1 = 2, 64                          # N = 128
    s1 = jax.random.normal(keys[2], (B1, T1, kdim), jnp.float32)
    a1 = jax.random.normal(keys[3], (B1, T1, u_dim), jnp.float32)
    out1 = jax.block_until_ready(quadratic_cost(s1, a1, q_diag_log, r_diag_log))
    ref1 = quadratic_cost_ref(s1, a1, q_diag_log, r_diag_log)
    assert out1.shape == (B1 * T1,)
    assert jnp.allclose(out1, ref1, rtol=5e-3, atol=5e-3)

    # 2) Packed path with several grid steps (exercises tiling / pipelining).
    B2, T2 = 32, 128                        # N = 4096, tile_rows=1024 -> grid=4
    s2 = jax.random.normal(keys[4], (B2, T2, kdim), jnp.float32)
    a2 = jax.random.normal(keys[5], (B2, T2, u_dim), jnp.float32)
    out2 = jax.block_until_ready(
        quadratic_cost(s2, a2, q_diag_log, r_diag_log, tile_rows=1024))
    ref2 = quadratic_cost_ref(s2, a2, q_diag_log, r_diag_log)
    assert jnp.allclose(out2, ref2, rtol=5e-3, atol=5e-3)

    # 3) Row-wise fallback path (N not a multiple of 128).
    B3, T3 = 2, 8                           # N = 16
    s3 = jax.random.normal(keys[6], (B3, T3, kdim), jnp.float32)
    a3 = jax.random.normal(keys[7], (B3, T3, u_dim), jnp.float32)
    out3 = jax.block_until_ready(quadratic_cost(s3, a3, q_diag_log, r_diag_log))
    ref3 = quadratic_cost_ref(s3, a3, q_diag_log, r_diag_log)
    assert jnp.allclose(out3, ref3, rtol=1e-5, atol=1e-5)

    # 4) Module forward(): u = clip(-K[0] g0 + k[0], -1, 1).
    A_mat = 0.3 * jax.random.normal(keys[8], (kdim, kdim), jnp.float32)
    B_mat = 0.3 * jax.random.normal(keys[9], (kdim, u_dim), jnp.float32)
    g0 = jax.random.normal(keys[10], (2, kdim), jnp.float32)
    u = jax.block_until_ready(
        koopman_lqr_forward(g0, A_mat, B_mat, q_diag_log, r_diag_log, horizon))
    K0 = _solve_lqr_K0(A_mat, B_mat, q_diag_log, r_diag_log, horizon)
    u_ref = jnp.clip(-(g0[:, None, :] * K0[None, :, :]).sum(-1), -1.0, 1.0)
    assert u.shape == (2, u_dim)
    assert jnp.allclose(u, u_ref, rtol=5e-3, atol=5e-3)

    print("KERNEL_OK")
</pallas_src>

<mosaic_0001>
module attributes {stable_mosaic.version = 11 : i64} {
  func.func @_cost_kernel_packed(%arg0: i32, %arg1: memref<512x128xf32, #tpu.memory_space<vmem>>, %arg2: memref<256x128xf32, #tpu.memory_space<vmem>>, %arg3: memref<1x512xf32, #tpu.memory_space<vmem>>, %arg4: memref<1x256xf32, #tpu.memory_space<vmem>>, %arg5: memref<1x128xf32, #tpu.memory_space<vmem>>) attributes {dimension_semantics = [#tpu.dimension_semantics<parallel>], iteration_bounds = array<i64: 1>, scalar_prefetch = 0 : i64, scratch_operands = 0 : i64, tpu.core_type = #tpu.core_type<tc>, window_params = [{pipeline_mode = #tpu.pipeline_mode<synchronous>, transform_indices = @transform_0, window_bounds = array<i64: 512, 128>}, {pipeline_mode = #tpu.pipeline_mode<synchronous>, transform_indices = @transform_1, window_bounds = array<i64: 256, 128>}, {transform_indices = @transform_2, window_bounds = array<i64: 1, 512>}, {transform_indices = @transform_3, window_bounds = array<i64: 1, 256>}, {transform_indices = @transform_4, window_bounds = array<i64: 1, 128>}]} {
    %c0 = arith.constant 0 : index
    %c0_0 = arith.constant 0 : index
    %0 = vector.load %arg3[%c0, %c0_0] : memref<1x512xf32, #tpu.memory_space<vmem>>, vector<1x512xf32>
    %c0_1 = arith.constant 0 : index
    %c0_2 = arith.constant 0 : index
    %1 = vector.load %arg4[%c0_1, %c0_2] : memref<1x256xf32, #tpu.memory_space<vmem>>, vector<1x256xf32>
    %2 = arith.mulf %0, %0 : vector<1x512xf32>
    %c0_3 = arith.constant 0 : index
    %c0_4 = arith.constant 0 : index
    %3 = vector.load %arg1[%c0_3, %c0_4] : memref<512x128xf32, #tpu.memory_space<vmem>>, vector<512x128xf32>
    %cst = arith.constant dense<0.000000e+00> : vector<1x128xf32>
    %4 = tpu.matmul %2, %3, %cst {dimension_numbers = #tpu.dot_dimension_numbers<[1], [0], [0], [1], [0, 0, 1, 1], [], []>, precision = #tpu.contract_precision<fp32>} : vector<1x512xf32>, vector<512x128xf32>, vector<1x128xf32> -> vector<1x128xf32>
    %5 = arith.mulf %1, %1 : vector<1x256xf32>
    %c0_5 = arith.constant 0 : index
    %c0_6 = arith.constant 0 : index
    %6 = vector.load %arg2[%c0_5, %c0_6] : memref<256x128xf32, #tpu.memory_space<vmem>>, vector<256x128xf32>
    %cst_7 = arith.constant dense<0.000000e+00> : vector<1x128xf32>
    %7 = tpu.matmul %5, %6, %cst_7 {dimension_numbers = #tpu.dot_dimension_numbers<[1], [0], [0], [1], [0, 0, 1, 1], [], []>, precision = #tpu.contract_precision<fp32>} : vector<1x256xf32>, vector<256x128xf32>, vector<1x128xf32> -> vector<1x128xf32>
    %8 = arith.addf %4, %7 : vector<1x128xf32>
    %c0_8 = arith.constant 0 : index
    %c0_9 = arith.constant 0 : index
    %9 = vector.load %arg5[%c0_8, %c0_9] : memref<1x128xf32, #tpu.memory_space<vmem>>, vector<1x128xf32>
    tpu.vector_store %arg5[%c0_8, %c0_9], %8 {strides = array<i32>} : memref<1x128xf32, #tpu.memory_space<vmem>>, vector<1x128xf32>,
    return
  }
  func.func @transform_0(%arg0: i32) -> (i32, i32) {
    %c0_i32 = arith.constant 0 : i32
    %c0_i32_0 = arith.constant 0 : i32
    %c0_i32_1 = arith.constant 0 : i32
    return %c0_i32, %c0_i32_0 : i32, i32
  }
  func.func @transform_1(%arg0: i32) -> (i32, i32) {
    %c0_i32 = arith.constant 0 : i32
    %c0_i32_0 = arith.constant 0 : i32
    %c0_i32_1 = arith.constant 0 : i32
    return %c0_i32, %c0_i32_0 : i32, i32
  }
  func.func @transform_2(%arg0: i32) -> (i32, i32) {
    %c0_i32 = arith.constant 0 : i32
    %c0_i32_0 = arith.constant 0 : i32
    return %arg0, %c0_i32 : i32, i32
  }
  func.func @transform_3(%arg0: i32) -> (i32, i32) {
    %c0_i32 = arith.constant 0 : i32
    %c0_i32_0 = arith.constant 0 : i32
    return %arg0, %c0_i32 : i32, i32
  }
  func.func @transform_4(%arg0: i32) -> (i32, i32) {
    %c0_i32 = arith.constant 0 : i32
    %c0_i32_0 = arith.constant 0 : i32
    return %arg0, %c0_i32 : i32, i32
  }
}

</mosaic_0001>

<llo_original>
// kernel: tpu_custom_call.1
$region0: #{tpu_custom_call.1}
  #allocation0 [shape = 'u32[]', space=smem, size = 0x4, offset = 0x4, fixed_abs, tag = 'smem constant byte address 0x4 - core index']
  #allocation1 [shape = 'u32[144,128]{1,0:T(1,128)}', space=vmem, size = 0x12000, scoped, tag = 'internal scratch']
  %s0 = inlined_call_operand.hbm [shape: f32[512,128], index: 0, kind: input, shape index: {}]
  %s1 = inlined_call_operand.hbm [shape: f32[256,128], index: 1, kind: input, shape index: {}]
  %s2 = inlined_call_operand.hbm [shape: f32[1,512], index: 2, kind: input, shape index: {}]
  %s3 = inlined_call_operand.vmem [shape: f32[1,256], index: 3, kind: input, shape index: {}]
  %s4 = inlined_call_operand.hbm [shape: f32[1,128], index: 4, kind: output, shape index: {}]
  %s5 = sld [smem:[#allocation0]]
  $region38: #{tpu_custom_call.1} parent=0
    _
  %s7 = ssub.s32 1, %s5
  %s8 = scalar_select 0, %s7, %s5
  $region1: #{tpu_custom_call.1} parent=0
    #allocation2 [shape = 'u8[262144]{0}', space=vmem, size = 0x40000, scoped, tag = 'input window, operand 0, single buffered']
    #allocation3 [shape = 's32[1]{0}', space=sflag, size = 0x4, scoped, tag = 'scoped memory for tpu_custom_call.1']
    #allocation4 [shape = 's32[1]{0}', space=sflag, size = 0x4, scoped, tag = 'scoped memory for tpu_custom_call.1']
    #allocation5 [shape = 'u8[131072]{0}', space=vmem, size = 0x20000, scoped, tag = 'input window, operand 1, single buffered']
    #allocation6 [shape = 's32[1]{0}', space=sflag, size = 0x4, scoped, tag = 'scoped memory for tpu_custom_call.1']
    #allocation7 [shape = 'u8[2048]{0}', space=vmem, size = 0x800, scoped, tag = 'input window, operand 2, single buffered']
    #allocation8 [shape = 'u8[512]{0}', space=vmem, size = 0x400, scoped, tag = 'output window, operand 0, single buffered']
    %9 = vsyncpa [#allocation3], 0
    %10 = vsyncpa [#allocation6], 0
    %11 = vsyncpa [#allocation4], 0
    // Predicated region
    $region2: #{tpu_custom_call.1} parent=1 // pred_check
      _
    $region3: #{tpu_custom_call.1} parent=1 // pred_check_branch
      %13 = sbr.rel (0) target = $region5
    $region4: #{tpu_custom_call.1} parent=1 // pred_region
      %s15 = ssub.s32 8192, 8192
      %16 = vsyncadd [#allocation3], %s15
      %s17 = sshll.u32 [#allocation2], 4
      %s18 = int_to_ptr.vmem [resolvable:$true] %s17
      %23 = dma.hbm_to_vmem [thread:$0]  %s0, 8192, %s18, [#allocation3], 128, 128, 8
    $region5: #{tpu_custom_call.1} parent=1 // pred_fallthru
      _
    // Predicated region
    $region6: #{tpu_custom_call.1} parent=1 // pred_check
      _
    $region7: #{tpu_custom_call.1} parent=1 // pred_check_branch
      %25 = sbr.rel (0) target = $region9
    $region8: #{tpu_custom_call.1} parent=1 // pred_region
      %s27 = ssub.s32 4096, 4096
      %28 = vsyncadd [#allocation6], %s27
      %s29 = sshll.u32 [#allocation5], 4
      %s30 = int_to_ptr.vmem [resolvable:$true] %s29
      %35 = dma.hbm_to_vmem [thread:$0]  %s1, 4096, %s30, [#allocation6], 128, 128, 8
    $region9: #{tpu_custom_call.1} parent=1 // pred_fallthru
      _
    // Predicated region
    $region10: #{tpu_custom_call.1} parent=1 // pred_check
      _
    $region11: #{tpu_custom_call.1} parent=1 // pred_check_branch
      %37 = sbr.rel (0) target = $region13
    $region12: #{tpu_custom_call.1} parent=1 // pred_region
      %s39 = ssub.s32 64, 64
      %40 = vsyncadd [#allocation6], %s39
      %s42 = sshll.u32 [#allocation7], 4
      %s43 = int_to_ptr.vmem [resolvable:$true] %s42
      %45 = dma.hbm_to_vmem [thread:$0]  %s2, 64, %s43, [#allocation6]
    $region13: #{tpu_custom_call.1} parent=1 // pred_fallthru
      _
    // Predicated region
    $region14: #{tpu_custom_call.1} parent=1 // pred_check
      _
    $region15: #{tpu_custom_call.1} parent=1 // pred_check_branch
      %47 = sbr.rel (0) target = $region17
    $region16: #{tpu_custom_call.1} parent=1 // pred_region
      _
    $region17: #{tpu_custom_call.1} parent=1 // pred_fallthru
      _
    // Predicated region
    $region18: #{tpu_custom_call.1} parent=1 // pred_check
      _
    $region19: #{tpu_custom_call.1} parent=1 // pred_check_branch
      %49 = sbr.rel (0) target = $region21
    $region20: #{tpu_custom_call.1} parent=1 // pred_region
      %50 = dma.done [#allocation3], 8192
    $region21: #{tpu_custom_call.1} parent=1 // pred_fallthru
      _
    // Predicated region
    $region22: #{tpu_custom_call.1} parent=1 // pred_check
      _
    $region23: #{tpu_custom_call.1} parent=1 // pred_check_branch
      %52 = sbr.rel (0) target = $region25
    $region24: #{tpu_custom_call.1} parent=1 // pred_region
      %53 = dma.done [#allocation6], 4096
    $region25: #{tpu_custom_call.1} parent=1 // pred_fallthru
      _
    // Predicated region
    $region26: #{tpu_custom_call.1} parent=1 // pred_check
      _
    $region27: #{tpu_custom_call.1} parent=1 // pred_check_branch
      %55 = sbr.rel (0) target = $region29
    $region28: #{tpu_custom_call.1} parent=1 // pred_region
      %56 = dma.done [#allocation6], 64
    $region29: #{tpu_custom_call.1} parent=1 // pred_fallthru
      _
    %v57 = vld [vmem:[#allocation7] sm:$0xf]
    %v58 = vld [vmem:[%s3] sm:$0x3]
    %v59 = vmul.f32 %v57, %v57
    %v60 = vld [vmem:[#allocation2] sm:$0xff]
    %v61 = vld [vmem:[#allocation2 + $0x8] sm:$0xff]
    %v62 = vld [vmem:[#allocation2 + $0x10] sm:$0xff]
    %v63 = vld [vmem:[#allocation2 + $0x18] sm:$0xff]
    %v64 = vld [vmem:[#allocation2 + $0x20] sm:$0xff]
    %v65 = vld [vmem:[#allocation2 + $0x28] sm:$0xff]
    %v66 = vld [vmem:[#allocation2 + $0x30] sm:$0xff]
    %v67 = vld [vmem:[#allocation2 + $0x38] sm:$0xff]
    %v68 = vld [vmem:[#allocation2 + $0x40] sm:$0xff]
    %v69 = vld [vmem:[#allocation2 + $0x48] sm:$0xff]
    %v70 = vld [vmem:[#allocation2 + $0x50] sm:$0xff]
    %v71 = vld [vmem:[#allocation2 + $0x58] sm:$0xff]
    %v72 = vld [vmem:[#allocation2 + $0x60] sm:$0xff]
    %v73 = vld [vmem:[#allocation2 + $0x68] sm:$0xff]
    %v74 = vld [vmem:[#allocation2 + $0x70] sm:$0xff]
    %v75 = vld [vmem:[#allocation2 + $0x78] sm:$0xff]
    %v76 = vld [vmem:[#allocation2 + $0x80] sm:$0xff]
    %v77 = vld [vmem:[#allocation2 + $0x88] sm:$0xff]
    %v78 = vld [vmem:[#allocation2 + $0x90] sm:$0xff]
    %v79 = vld [vmem:[#allocation2 + $0x98] sm:$0xff]
    %v80 = vld [vmem:[#allocation2 + $0xa0] sm:$0xff]
    %v81 = vld [vmem:[#allocation2 + $0xa8] sm:$0xff]
    %v82 = vld [vmem:[#allocation2 + $0xb0] sm:$0xff]
    %v83 = vld [vmem:[#allocation2 + $0xb8] sm:$0xff]
    %v84 = vld [vmem:[#allocation2 + $0xc0] sm:$0xff]
    %v85 = vld [vmem:[#allocation2 + $0xc8] sm:$0xff]
    %v86 = vld [vmem:[#allocation2 + $0xd0] sm:$0xff]
    %v87 = vld [vmem:[#allocation2 + $0xd8] sm:$0xff]
    %v88 = vld [vmem:[#allocation2 + $0xe0] sm:$0xff]
    %v89 = vld [vmem:[#allocation2 + $0xe8] sm:$0xff]
    %v90 = vld [vmem:[#allocation2 + $0xf0] sm:$0xff]
    %v91 = vld [vmem:[#allocation2 + $0xf8] sm:$0xff]
    %v92 = vld [vmem:[#allocation2 + $0x100] sm:$0xff]
    %v93 = vld [vmem:[#allocation2 + $0x108] sm:$0xff]
    %v94 = vld [vmem:[#allocation2 + $0x110] sm:$0xff]
    %v95 = vld [vmem:[#allocation2 + $0x118] sm:$0xff]
    %v96 = vld [vmem:[#allocation2 + $0x120] sm:$0xff]
    %v97 = vld [vmem:[#allocation2 + $0x128] sm:$0xff]
    %v98 = vld [vmem:[#allocation2 + $0x130] sm:$0xff]
    %v99 = vld [vmem:[#allocation2 + $0x138] sm:$0xff]
    %v100 = vld [vmem:[#allocation2 + $0x140] sm:$0xff]
    %v101 = vld [vmem:[#allocation2 + $0x148] sm:$0xff]
    %v102 = vld [vmem:[#allocation2 + $0x150] sm:$0xff]
    %v103 = vld [vmem:[#allocation2 + $0x158] sm:$0xff]
    %v104 = vld [vmem:[#allocation2 + $0x160] sm:$0xff]
    %v105 = vld [vmem:[#allocation2 + $0x168] sm:$0xff]
    %v106 = vld [vmem:[#allocation2 + $0x170] sm:$0xff]
    %v107 = vld [vmem:[#allocation2 + $0x178] sm:$0xff]
    %v108 = vld [vmem:[#allocation2 + $0x180] sm:$0xff]
    %v109 = vld [vmem:[#allocation2 + $0x188] sm:$0xff]
    %v110 = vld [vmem:[#allocation2 + $0x190] sm:$0xff]
    %v111 = vld [vmem:[#allocation2 + $0x198] sm:$0xff]
    %v112 = vld [vmem:[#allocation2 + $0x1a0] sm:$0xff]
    %v113 = vld [vmem:[#allocation2 + $0x1a8] sm:$0xff]
    %v114 = vld [vmem:[#allocation2 + $0x1b0] sm:$0xff]
    %v115 = vld [vmem:[#allocation2 + $0x1b8] sm:$0xff]
    %v116 = vld [vmem:[#allocation2 + $0x1c0] sm:$0xff]
    %v117 = vld [vmem:[#allocation2 + $0x1c8] sm:$0xff]
    %v118 = vld [vmem:[#allocation2 + $0x1d0] sm:$0xff]
    %v119 = vld [vmem:[#allocation2 + $0x1d8] sm:$0xff]
    %v120 = vld [vmem:[#allocation2 + $0x1e0] sm:$0xff]
    %v121 = vld [vmem:[#allocation2 + $0x1e8] sm:$0xff]
    %v122 = vld [vmem:[#allocation2 + $0x1f0] sm:$0xff]
    %v123 = vld [vmem:[#allocation2 + $0x1f8] sm:$0xff]
    %v124 = vmul.f32 %v58, %v58
    %v125 = vld [vmem:[#allocation5] sm:$0xff]
    %v126 = vld [vmem:[#allocation5 + $0x8] sm:$0xff]
    %v127 = vld [vmem:[#allocation5 + $0x10] sm:$0xff]
    %v128 = vld [vmem:[#allocation5 + $0x18] sm:$0xff]
    %v129 = vld [vmem:[#allocation5 + $0x20] sm:$0xff]
    %v130 = vld [vmem:[#allocation5 + $0x28] sm:$0xff]
    %v131 = vld [vmem:[#allocation5 + $0x30] sm:$0xff]
    %v132 = vld [vmem:[#allocation5 + $0x38] sm:$0xff]
    %v133 = vld [vmem:[#allocation5 + $0x40] sm:$0xff]
    %v134 = vld [vmem:[#allocation5 + $0x48] sm:$0xff]
    %v135 = vld [vmem:[#allocation5 + $0x50] sm:$0xff]
    %v136 = vld [vmem:[#allocation5 + $0x58] sm:$0xff]
    %v137 = vld [vmem:[#allocation5 + $0x60] sm:$0xff]
    %v138 = vld [vmem:[#allocation5 + $0x68] sm:$0xff]
    %v139 = vld [vmem:[#allocation5 + $0x70] sm:$0xff]
    %v140 = vld [vmem:[#allocation5 + $0x78] sm:$0xff]
    %v141 = vld [vmem:[#allocation5 + $0x80] sm:$0xff]
    %v142 = vld [vmem:[#allocation5 + $0x88] sm:$0xff]
    %v143 = vld [vmem:[#allocation5 + $0x90] sm:$0xff]
    %v144 = vld [vmem:[#allocation5 + $0x98] sm:$0xff]
    %v145 = vld [vmem:[#allocation5 + $0xa0] sm:$0xff]
    %v146 = vld [vmem:[#allocation5 + $0xa8] sm:$0xff]
    %v147 = vld [vmem:[#allocation5 + $0xb0] sm:$0xff]
    %v148 = vld [vmem:[#allocation5 + $0xb8] sm:$0xff]
    %v149 = vld [vmem:[#allocation5 + $0xc0] sm:$0xff]
    %v150 = vld [vmem:[#allocation5 + $0xc8] sm:$0xff]
    %v151 = vld [vmem:[#allocation5 + $0xd0] sm:$0xff]
    %v152 = vld [vmem:[#allocation5 + $0xd8] sm:$0xff]
    %v153 = vld [vmem:[#allocation5 + $0xe0] sm:$0xff]
    %v154 = vld [vmem:[#allocation5 + $0xe8] sm:$0xff]
    %v155 = vld [vmem:[#allocation5 + $0xf0] sm:$0xff]
    %v156 = vld [vmem:[#allocation5 + $0xf8] sm:$0xff]
    %v158 = vlaneseq
    %v159 = vshrl.u32 %v158, 7
    %v160 = vsub.s32 0, %v159
    %v161 = vrot.slane %v124, %v160
    %v162 = vlaneseq
    %v163 = vshrl.u32 %v162, 7
    %v164 = vsub.s32 1, %v163
    %v165 = vrot.slane %v124, %v164
    %168 = vmatprep.subr.mxu0 0.0
    %v169 = vand.u32 %v140, 4294901760
    %170 = vmatpush1.msra.mxu0 %v169
    %171 = vmatprep.subr.mxu0 0.0
    %v172 = vand.u32 %v139, 4294901760
    %173 = vmatpush1.msra.mxu0 %v172
    %174 = vmatprep.subr.mxu0 0.0
    %v175 = vand.u32 %v138, 4294901760
    %176 = vmatpush1.msra.mxu0 %v175
    %177 = vmatprep.subr.mxu0 0.0
    %v178 = vand.u32 %v137, 4294901760
    %179 = vmatpush1.msra.mxu0 %v178
    %180 = vmatprep.subr.mxu0 0.0
    %v181 = vand.u32 %v136, 4294901760
    %182 = vmatpush1.msra.mxu0 %v181
    %183 = vmatprep.subr.mxu0 0.0
    %v184 = vand.u32 %v135, 4294901760
    %185 = vmatpush1.msra.mxu0 %v184
    %186 = vmatprep.subr.mxu0 0.0
    %v187 = vand.u32 %v134, 4294901760
    %188 = vmatpush1.msra.mxu0 %v187
    %189 = vmatprep.subr.mxu0 0.0
    %v190 = vand.u32 %v133, 4294901760
    %191 = vmatpush1.msra.mxu0 %v190
    %192 = vmatprep.subr.mxu0 0.0
    %v193 = vand.u32 %v132, 4294901760
    %194 = vmatpush1.msra.mxu0 %v193
    %195 = vmatprep.subr.mxu0 0.0
    %v196 = vand.u32 %v131, 4294901760
    %197 = vmatpush1.msra.mxu0 %v196
    %198 = vmatprep.subr.mxu0 0.0
    %v199 = vand.u32 %v130, 4294901760
    %200 = vmatpush1.msra.mxu0 %v199
    %201 = vmatprep.subr.mxu0 0.0
    %v202 = vand.u32 %v129, 4294901760
    %203 = vmatpush1.msra.mxu0 %v202
    %204 = vmatprep.subr.mxu0 0.0
    %v205 = vand.u32 %v128, 4294901760
    %206 = vmatpush1.msra.mxu0 %v205
    %207 = vmatprep.subr.mxu0 0.0
    %v208 = vand.u32 %v127, 4294901760
    %209 = vmatpush1.msra.mxu0 %v208
    %210 = vmatprep.subr.mxu0 0.0
    %v211 = vand.u32 %v126, 4294901760
    %212 = vmatpush1.msra.mxu0 %v211
    %213 = vmatprep.subr.mxu0 0.0
    %v214 = vand.u32 %v125, 4294901760
    %215 = vmatpush1.msra.mxu0 %v214
    %216 = vmatprep.subr.mxu0 0.0
    %v217 = vand.u32 %v156, 4294901760
    %218 = vmatpush2.msra.mxu0 %v217
    %219 = vmatprep.subr.mxu0 0.0
    %v220 = vand.u32 %v155, 4294901760
    %221 = vmatpush2.msra.mxu0 %v220
    %222 = vmatprep.subr.mxu0 0.0
    %v223 = vand.u32 %v154, 4294901760
    %224 = vmatpush2.msra.mxu0 %v223
    %225 = vmatprep.subr.mxu0 0.0
    %v226 = vand.u32 %v153, 4294901760
    %227 = vmatpush2.msra.mxu0 %v226
    %228 = vmatprep.subr.mxu0 0.0
    %v229 = vand.u32 %v152, 4294901760
    %230 = vmatpush2.msra.mxu0 %v229
    %231 = vmatprep.subr.mxu0 0.0
    %v232 = vand.u32 %v151, 4294901760
    %233 = vmatpush2.msra.mxu0 %v232
    %234 = vmatprep.subr.mxu0 0.0
    %v235 = vand.u32 %v150, 4294901760
    %236 = vmatpush2.msra.mxu0 %v235
    %237 = vmatprep.subr.mxu0 0.0
    %v238 = vand.u32 %v149, 4294901760
    %239 = vmatpush2.msra.mxu0 %v238
    %240 = vmatprep.subr.mxu0 0.0
    %v241 = vand.u32 %v148, 4294901760
    %242 = vmatpush2.msra.mxu0 %v241
    %243 = vmatprep.subr.mxu0 0.0
    %v244 = vand.u32 %v147, 4294901760
    %245 = vmatpush2.msra.mxu0 %v244
    %246 = vmatprep.subr.mxu0 0.0
    %v247 = vand.u32 %v146, 4294901760
    %248 = vmatpush2.msra.mxu0 %v247
    %249 = vmatprep.subr.mxu0 0.0
    %v250 = vand.u32 %v145, 4294901760
    %251 = vmatpush2.msra.mxu0 %v250
    %252 = vmatprep.subr.mxu0 0.0
    %v253 = vand.u32 %v144, 4294901760
    %254 = vmatpush2.msra.mxu0 %v253
    %255 = vmatprep.subr.mxu0 0.0
    %v256 = vand.u32 %v143, 4294901760
    %257 = vmatpush2.msra.mxu0 %v256
    %258 = vmatprep.subr.mxu0 0.0
    %v259 = vand.u32 %v142, 4294901760
    %260 = vmatpush2.msra.mxu0 %v259
    %261 = vmatprep.subr.mxu0 0.0
    %v262 = vand.u32 %v141, 4294901760
    %263 = vmatpush2.msra.mxu0 %v262
    %v264 = vand.u32 %v165, 4294901760
    %v265 = vsub.f32 %v165, %v264
    %v266 = vand.u32 %v265, 4294901760
    %v267 = vsub.f32 %v265, %v266
    %v268 = vand.u32 %v267, 4294901760
    %269 = vmatprep.mubr.f32.mxu0 %v268
    %v270 = vand.u32 %v161, 4294901760
    %v271 = vsub.f32 %v161, %v270
    %v272 = vand.u32 %v271, 4294901760
    %v273 = vsub.f32 %v271, %v272
    %v274 = vand.u32 %v273, 4294901760
    %275 = vmatmul.mubr.f32.gmra.mxu0 %v274
    %v276 = vpop.f32.mrf.mxu0
    %v277 = vadd.f32 0.0, %v276
    %v278 = vpop.f32.mrf.mxu0
    %279 = vdwg.mxu0
    %280 = vmatprep.subr.mxu0 0.0
    %v281 = vand.u32 %v140, 4294901760
    %v282 = vsub.f32 %v140, %v281
    %v283 = vand.u32 %v282, 4294901760
    %v284 = vsub.f32 %v282, %v283
    %v285 = vand.u32 %v284, 4294901760
    %286 = vmatpush1.msra.mxu0 %v285
    %287 = vmatprep.subr.mxu0 0.0
    %v288 = vand.u32 %v139, 4294901760
    %v289 = vsub.f32 %v139, %v288
    %v290 = vand.u32 %v289, 4294901760
    %v291 = vsub.f32 %v289, %v290
    %v292 = vand.u32 %v291, 4294901760
    %293 = vmatpush1.msra.mxu0 %v292
    %294 = vmatprep.subr.mxu0 0.0
    %v295 = vand.u32 %v138, 4294901760
    %v296 = vsub.f32 %v138, %v295
    %v297 = vand.u32 %v296, 4294901760
    %v298 = vsub.f32 %v296, %v297
    %v299 = vand.u32 %v298, 4294901760
    %300 = vmatpush1.msra.mxu0 %v299
    %301 = vmatprep.subr.mxu0 0.0
    %v302 = vand.u32 %v137, 4294901760
    %v303 = vsub.f32 %v137, %v302
    %v304 = vand.u32 %v303, 4294901760
    %v305 = vsub.f32 %v303, %v304
    %v306 = vand.u32 %v305, 4294901760
    %307 = vmatpush1.msra.mxu0 %v306
    %308 = vmatprep.subr.mxu0 0.0
    %v309 = vand.u32 %v136, 4294901760
    %v310 = vsub.f32 %v136, %v309
    %v311 = vand.u32 %v310, 4294901760
    %v312 = vsub.f32 %v310, %v311
    %v313 = vand.u32 %v312, 4294901760
    %314 = vmatpush1.msra.mxu0 %v313
    %315 = vmatprep.subr.mxu0 0.0
    %v316 = vand.u32 %v135, 4294901760
    %v317 = vsub.f32 %v135, %v316
    %v318 = vand.u32 %v317, 4294901760
    %v319 = vsub.f32 %v317, %v318
    %v320 = vand.u32 %v319, 4294901760
    %321 = vmatpush1.msra.mxu0 %v320
    %322 = vmatprep.subr.mxu0 0.0
    %v323 = vand.u32 %v134, 4294901760
    %v324 = vsub.f32 %v134, %v323
    %v325 = vand.u32 %v324, 4294901760
    %v326 = vsub.f32 %v324, %v325
    %v327 = vand.u32 %v326, 4294901760
    %328 = vmatpush1.msra.mxu0 %v327
    %329 = vmatprep.subr.mxu0 0.0
    %v330 = vand.u32 %v133, 4294901760
    %v331 = vsub.f32 %v133, %v330
    %v332 = vand.u32 %v331, 4294901760
    %v333 = vsub.f32 %v331, %v332
    %v334 = vand.u32 %v333, 4294901760
    %335 = vmatpush1.msra.mxu0 %v334
    %336 = vmatprep.subr.mxu0 0.0
    %v337 = vand.u32 %v132, 4294901760
    %v338 = vsub.f32 %v132, %v337
    %v339 = vand.u32 %v338, 4294901760
    %v340 = vsub.f32 %v338, %v339
    %v341 = vand.u32 %v340, 4294901760
    %342 = vmatpush1.msra.mxu0 %v341
    %343 = vmatprep.subr.mxu0 0.0
    %v344 = vand.u32 %v131, 4294901760
    %v345 = vsub.f32 %v131, %v344
    %v346 = vand.u32 %v345, 4294901760
    %v347 = vsub.f32 %v345, %v346
    %v348 = vand.u32 %v347, 4294901760
    %349 = vmatpush1.msra.mxu0 %v348
    %350 = vmatprep.subr.mxu0 0.0
    %v351 = vand.u32 %v130, 4294901760
    %v352 = vsub.f32 %v130, %v351
    %v353 = vand.u32 %v352, 4294901760
    %v354 = vsub.f32 %v352, %v353
    %v355 = vand.u32 %v354, 4294901760
    %356 = vmatpush1.msra.mxu0 %v355
    %357 = vmatprep.subr.mxu0 0.0
    %v358 = vand.u32 %v129, 4294901760
    %v359 = vsub.f32 %v129, %v358
    %v360 = vand.u32 %v359, 4294901760
    %v361 = vsub.f32 %v359, %v360
    %v362 = vand.u32 %v361, 4294901760
    %363 = vmatpush1.msra.mxu0 %v362
    %364 = vmatprep.subr.mxu0 0.0
    %v365 = vand.u32 %v128, 4294901760
    %v366 = vsub.f32 %v128, %v365
    %v367 = vand.u32 %v366, 4294901760
    %v368 = vsub.f32 %v366, %v367
    %v369 = vand.u32 %v368, 4294901760
    %370 = vmatpush1.msra.mxu0 %v369
    %371 = vmatprep.subr.mxu0 0.0
    %v372 = vand.u32 %v127, 4294901760
    %v373 = vsub.f32 %v127, %v372
    %v374 = vand.u32 %v373, 4294901760
    %v375 = vsub.f32 %v373, %v374
    %v376 = vand.u32 %v375, 4294901760
    %377 = vmatpush1.msra.mxu0 %v376
    %378 = vmatprep.subr.mxu0 0.0
    %v379 = vand.u32 %v126, 4294901760
    %v380 = vsub.f32 %v126, %v379
    %v381 = vand.u32 %v380, 4294901760
    %v382 = vsub.f32 %v380, %v381
    %v383 = vand.u32 %v382, 4294901760
    %384 = vmatpush1.msra.mxu0 %v383
    %385 = vmatprep.subr.mxu0 0.0
    %v386 = vand.u32 %v125, 4294901760
    %v387 = vsub.f32 %v125, %v386
    %v388 = vand.u32 %v387, 4294901760
    %v389 = vsub.f32 %v387, %v388
    %v390 = vand.u32 %v389, 4294901760
    %391 = vmatpush1.msra.mxu0 %v390
    %392 = vmatprep.subr.mxu0 0.0
    %v393 = vand.u32 %v156, 4294901760
    %v394 = vsub.f32 %v156, %v393
    %v395 = vand.u32 %v394, 4294901760
    %v396 = vsub.f32 %v394, %v395
    %v397 = vand.u32 %v396, 4294901760
    %398 = vmatpush2.msra.mxu0 %v397
    %399 = vmatprep.subr.mxu0 0.0
    %v400 = vand.u32 %v155, 4294901760
    %v401 = vsub.f32 %v155, %v400
    %v402 = vand.u32 %v401, 4294901760
    %v403 = vsub.f32 %v401, %v402
    %v404 = vand.u32 %v403, 4294901760
    %405 = vmatpush2.msra.mxu0 %v404
    %406 = vmatprep.subr.mxu0 0.0
    %v407 = vand.u32 %v154, 4294901760
    %v408 = vsub.f32 %v154, %v407
    %v409 = vand.u32 %v408, 4294901760
    %v410 = vsub.f32 %v408, %v409
    %v411 = vand.u32 %v410, 4294901760
    %412 = vmatpush2.msra.mxu0 %v411
    %413 = vmatprep.subr.mxu0 0.0
    %v414 = vand.u32 %v153, 4294901760
    %v415 = vsub.f32 %v153, %v414
    %v416 = vand.u32 %v415, 4294901760
    %v417 = vsub.f32 %v415, %v416
    %v418 = vand.u32 %v417, 4294901760
    %419 = vmatpush2.msra.mxu0 %v418
    %420 = vmatprep.subr.mxu0 0.0
    %v421 = vand.u32 %v152, 4294901760
    %v422 = vsub.f32 %v152, %v421
    %v423 = vand.u32 %v422, 4294901760
    %v424 = vsub.f32 %v422, %v423
    %v425 = vand.u32 %v424, 4294901760
    %426 = vmatpush2.msra.mxu0 %v425
    %427 = vmatprep.subr.mxu0 0.0
    %v428 = vand.u32 %v151, 4294901760
    %v429 = vsub.f32 %v151, %v428
    %v430 = vand.u32 %v429, 4294901760
    %v431 = vsub.f32 %v429, %v430
    %v432 = vand.u32 %v431, 4294901760
    %433 = vmatpush2.msra.mxu0 %v432
    %434 = vmatprep.subr.mxu0 0.0
    %v435 = vand.u32 %v150, 4294901760
    %v436 = vsub.f32 %v150, %v435
    %v437 = vand.u32 %v436, 4294901760
    %v438 = vsub.f32 %v436, %v437
    %v439 = vand.u32 %v438, 4294901760
    %440 = vmatpush2.msra.mxu0 %v439
    %441 = vmatprep.subr.mxu0 0.0
    %v442 = vand.u32 %v149, 4294901760
    %v443 = vsub.f32 %v149, %v442
    %v444 = vand.u32 %v443, 4294901760
    %v445 = vsub.f32 %v443, %v444
    %v446 = vand.u32 %v445, 4294901760
    %447 = vmatpush2.msra.mxu0 %v446
    %448 = vmatprep.subr.mxu0 0.0
    %v449 = vand.u32 %v148, 4294901760
    %v450 = vsub.f32 %v148, %v449
    %v451 = vand.u32 %v450, 4294901760
    %v452 = vsub.f32 %v450, %v451
    %v453 = vand.u32 %v452, 4294901760
    %454 = vmatpush2.msra.mxu0 %v453
    %455 = vmatprep.subr.mxu0 0.0
    %v456 = vand.u32 %v147, 4294901760
    %v457 = vsub.f32 %v147, %v456
    %v458 = vand.u32 %v457, 4294901760
    %v459 = vsub.f32 %v457, %v458
    %v460 = vand.u32 %v459, 4294901760
    %461 = vmatpush2.msra.mxu0 %v460
    %462 = vmatprep.subr.mxu0 0.0
    %v463 = vand.u32 %v146, 4294901760
    %v464 = vsub.f32 %v146, %v463
    %v465 = vand.u32 %v464, 4294901760
    %v466 = vsub.f32 %v464, %v465
    %v467 = vand.u32 %v466, 4294901760
    %468 = vmatpush2.msra.mxu0 %v467
    %469 = vmatprep.subr.mxu0 0.0
    %v470 = vand.u32 %v145, 4294901760
    %v471 = vsub.f32 %v145, %v470
    %v472 = vand.u32 %v471, 4294901760
    %v473 = vsub.f32 %v471, %v472
    %v474 = vand.u32 %v473, 4294901760
    %475 = vmatpush2.msra.mxu0 %v474
    %476 = vmatprep.subr.mxu0 0.0
    %v477 = vand.u32 %v144, 4294901760
    %v478 = vsub.f32 %v144, %v477
    %v479 = vand.u32 %v478, 4294901760
    %v480 = vsub.f32 %v478, %v479
    %v481 = vand.u32 %v480, 4294901760
    %482 = vmatpush2.msra.mxu0 %v481
    %483 = vmatprep.subr.mxu0 0.0
    %v484 = vand.u32 %v143, 4294901760
    %v485 = vsub.f32 %v143, %v484
    %v486 = vand.u32 %v485, 4294901760
    %v487 = vsub.f32 %v485, %v486
    %v488 = vand.u32 %v487, 4294901760
    %489 = vmatpush2.msra.mxu0 %v488
    %490 = vmatprep.subr.mxu0 0.0
    %v491 = vand.u32 %v142, 4294901760
    %v492 = vsub.f32 %v142, %v491
    %v493 = vand.u32 %v492, 4294901760
    %v494 = vsub.f32 %v492, %v493
    %v495 = vand.u32 %v494, 4294901760
    %496 = vmatpush2.msra.mxu0 %v495
    %497 = vmatprep.subr.mxu0 0.0
    %v498 = vand.u32 %v141, 4294901760
    %v499 = vsub.f32 %v141, %v498
    %v500 = vand.u32 %v499, 4294901760
    %v501 = vsub.f32 %v499, %v500
    %v502 = vand.u32 %v501, 4294901760
    %503 = vmatpush2.msra.mxu0 %v502
    %v504 = vand.u32 %v165, 4294901760
    %505 = vmatprep.mubr.f32.mxu0 %v504
    %v506 = vand.u32 %v161, 4294901760
    %507 = vmatmul.mubr.f32.gmra.mxu0 %v506
    %v508 = vpop.f32.mrf.mxu0
    %v509 = vadd.f32 %v277, %v508
    %v510 = vpop.f32.mrf.mxu0
    %511 = vdwg.mxu0
    %512 = vmatprep.subr.mxu0 0.0
    %v513 = vand.u32 %v140, 4294901760
    %v514 = vsub.f32 %v140, %v513
    %515 = vmatpush1.msra.mxu0 %v514
    %516 = vmatprep.subr.mxu0 0.0
    %v517 = vand.u32 %v139, 4294901760
    %v518 = vsub.f32 %v139, %v517
    %519 = vmatpush1.msra.mxu0 %v518
    %520 = vmatprep.subr.mxu0 0.0
    %v521 = vand.u32 %v138, 4294901760
    %v522 = vsub.f32 %v138, %v521
    %523 = vmatpush1.msra.mxu0 %v522
    %524 = vmatprep.subr.mxu0 0.0
    %v525 = vand.u32 %v137, 4294901760
    %v526 = vsub.f32 %v137, %v525
    %527 = vmatpush1.msra.mxu0 %v526
    %528 = vmatprep.subr.mxu0 0.0
    %v529 = vand.u32 %v136, 4294901760
    %v530 = vsub.f32 %v136, %v529
    %531 = vmatpush1.msra.mxu0 %v530
    %532 = vmatprep.subr.mxu0 0.0
    %v533 = vand.u32 %v135, 4294901760
    %v534 = vsub.f32 %v135, %v533
    %535 = vmatpush1.msra.mxu0 %v534
    %536 = vmatprep.subr.mxu0 0.0
    %v537 = vand.u32 %v134, 4294901760
    %v538 = vsub.f32 %v134, %v537
    %539 = vmatpush1.msra.mxu0 %v538
    %540 = vmatprep.subr.mxu0 0.0
    %v541 = vand.u32 %v133, 4294901760
    %v542 = vsub.f32 %v133, %v541
    %543 = vmatpush1.msra.mxu0 %v542
    %544 = vmatprep.subr.mxu0 0.0
    %v545 = vand.u32 %v132, 4294901760
    %v546 = vsub.f32 %v132, %v545
    %547 = vmatpush1.msra.mxu0 %v546
    %548 = vmatprep.subr.mxu0 0.0
    %v549 = vand.u32 %v131, 4294901760
    %v550 = vsub.f32 %v131, %v549
    %551 = vmatpush1.msra.mxu0 %v550
    %552 = vmatprep.subr.mxu0 0.0
    %v553 = vand.u32 %v130, 4294901760
    %v554 = vsub.f32 %v130, %v553
    %555 = vmatpush1.msra.mxu0 %v554
    %556 = vmatprep.subr.mxu0 0.0
    %v557 = vand.u32 %v129, 4294901760
    %v558 = vsub.f32 %v129, %v557
    %559 = vmatpush1.msra.mxu0 %v558
    %560 = vmatprep.subr.mxu0 0.0
    %v561 = vand.u32 %v128, 4294901760
    %v562 = vsub.f32 %v128, %v561
    %563 = vmatpush1.msra.mxu0 %v562
    %564 = vmatprep.subr.mxu0 0.0
    %v565 = vand.u32 %v127, 4294901760
    %v566 = vsub.f32 %v127, %v565
    %567 = vmatpush1.msra.mxu0 %v566
    %568 = vmatprep.subr.mxu0 0.0
    %v569 = vand.u32 %v126, 4294901760
    %v570 = vsub.f32 %v126, %v569
    %571 = vmatpush1.msra.mxu0 %v570
    %572 = vmatprep.subr.mxu0 0.0
    %v573 = vand.u32 %v125, 4294901760
    %v574 = vsub.f32 %v125, %v573
    %575 = vmatpush1.msra.mxu0 %v574
    %576 = vmatprep.subr.mxu0 0.0
    %v577 = vand.u32 %v156, 4294901760
    %v578 = vsub.f32 %v156, %v577
    %579 = vmatpush2.msra.mxu0 %v578
    %580 = vmatprep.subr.mxu0 0.0
    %v581 = vand.u32 %v155, 4294901760
    %v582 = vsub.f32 %v155, %v581
    %583 = vmatpush2.msra.mxu0 %v582
    %584 = vmatprep.subr.mxu0 0.0
    %v585 = vand.u32 %v154, 4294901760
    %v586 = vsub.f32 %v154, %v585
    %587 = vmatpush2.msra.mxu0 %v586
    %588 = vmatprep.subr.mxu0 0.0
    %v589 = vand.u32 %v153, 4294901760
    %v590 = vsub.f32 %v153, %v589
    %591 = vmatpush2.msra.mxu0 %v590
    %592 = vmatprep.subr.mxu0 0.0
    %v593 = vand.u32 %v152, 4294901760
    %v594 = vsub.f32 %v152, %v593
    %595 = vmatpush2.msra.mxu0 %v594
    %596 = vmatprep.subr.mxu0 0.0
    %v597 = vand.u32 %v151, 4294901760
    %v598 = vsub.f32 %v151, %v597
    %599 = vmatpush2.msra.mxu0 %v598
    %600 = vmatprep.subr.mxu0 0.0
    %v601 = vand.u32 %v150, 4294901760
    %v602 = vsub.f32 %v150, %v601
    %603 = vmatpush2.msra.mxu0 %v602
    %604 = vmatprep.subr.mxu0 0.0
    %v605 = vand.u32 %v149, 4294901760
    %v606 = vsub.f32 %v149, %v605
    %607 = vmatpush2.msra.mxu0 %v606
    %608 = vmatprep.subr.mxu0 0.0
    %v609 = vand.u32 %v148, 4294901760
    %v610 = vsub.f32 %v148, %v609
    %611 = vmatpush2.msra.mxu0 %v610
    %612 = vmatprep.subr.mxu0 0.0
    %v613 = vand.u32 %v147, 4294901760
    %v614 = vsub.f32 %v147, %v613
    %615 = vmatpush2.msra.mxu0 %v614
    %616 = vmatprep.subr.mxu0 0.0
    %v617 = vand.u32 %v146, 4294901760
    %v618 = vsub.f32 %v146, %v617
    %619 = vmatpush2.msra.mxu0 %v618
    %620 = vmatprep.subr.mxu0 0.0
    %v621 = vand.u32 %v145, 4294901760
    %v622 = vsub.f32 %v145, %v621
    %623 = vmatpush2.msra.mxu0 %v622
    %624 = vmatprep.subr.mxu0 0.0
    %v625 = vand.u32 %v144, 4294901760
    %v626 = vsub.f32 %v144, %v625
    %627 = vmatpush2.msra.mxu0 %v626
    %628 = vmatprep.subr.mxu0 0.0
    %v629 = vand.u32 %v143, 4294901760
    %v630 = vsub.f32 %v143, %v629
    %631 = vmatpush2.msra.mxu0 %v630
    %632 = vmatprep.subr.mxu0 0.0
    %v633 = vand.u32 %v142, 4294901760
    %v634 = vsub.f32 %v142, %v633
    %635 = vmatpush2.msra.mxu0 %v634
    %636 = vmatprep.subr.mxu0 0.0
    %v637 = vand.u32 %v141, 4294901760
    %v638 = vsub.f32 %v141, %v637
    %639 = vmatpush2.msra.mxu0 %v638
    %v640 = vand.u32 %v165, 4294901760
    %v641 = vsub.f32 %v165, %v640
    %642 = vmatprep.mubr.f32.mxu0 %v641
    %v643 = vand.u32 %v161, 4294901760
    %v644 = vsub.f32 %v161, %v643
    %645 = vmatmul.mubr.f32.gmra.mxu0 %v644
    %v646 = vpop.f32.mrf.mxu0
    %v647 = vadd.f32 %v509, %v646
    %v648 = vpop.f32.mrf.mxu0
    %649 = vdwg.mxu0
    %650 = vmatprep.subr.mxu0 0.0
    %v651 = vand.u32 %v140, 4294901760
    %652 = vmatpush1.msra.mxu0 %v651
    %653 = vmatprep.subr.mxu0 0.0
    %v654 = vand.u32 %v139, 4294901760
    %655 = vmatpush1.msra.mxu0 %v654
    %656 = vmatprep.subr.mxu0 0.0
    %v657 = vand.u32 %v138, 4294901760
    %658 = vmatpush1.msra.mxu0 %v657
    %659 = vmatprep.subr.mxu0 0.0
    %v660 = vand.u32 %v137, 4294901760
    %661 = vmatpush1.msra.mxu0 %v660
    %662 = vmatprep.subr.mxu0 0.0
    %v663 = vand.u32 %v136, 4294901760
    %664 = vmatpush1.msra.mxu0 %v663
    %665 = vmatprep.subr.mxu0 0.0
    %v666 = vand.u32 %v135, 4294901760
    %667 = vmatpush1.msra.mxu0 %v666
    %668 = vmatprep.subr.mxu0 0.0
    %v669 = vand.u32 %v134, 4294901760
    %670 = vmatpush1.msra.mxu0 %v669
    %671 = vmatprep.subr.mxu0 0.0
    %v672 = vand.u32 %v133, 4294901760
    %673 = vmatpush1.msra.mxu0 %v672
    %674 = vmatprep.subr.mxu0 0.0
    %v675 = vand.u32 %v132, 4294901760
    %676 = vmatpush1.msra.mxu0 %v675
    %677 = vmatprep.subr.mxu0 0.0
    %v678 = vand.u32 %v131, 4294901760
    %679 = vmatpush1.msra.mxu0 %v678
    %680 = vmatprep.subr.mxu0 0.0
    %v681 = vand.u32 %v130, 4294901760
    %682 = vmatpush1.msra.mxu0 %v681
    %683 = vmatprep.subr.mxu0 0.0
    %v684 = vand.u32 %v129, 4294901760
    %685 = vmatpush1.msra.mxu0 %v684
    %686 = vmatprep.subr.mxu0 0.0
    %v687 = vand.u32 %v128, 4294901760
    %688 = vmatpush1.msra.mxu0 %v687
    %689 = vmatprep.subr.mxu0 0.0
    %v690 = vand.u32 %v127, 4294901760
    %691 = vmatpush1.msra.mxu0 %v690
    %692 = vmatprep.subr.mxu0 0.0
    %v693 = vand.u32 %v126, 4294901760
    %694 = vmatpush1.msra.mxu0 %v693
    %695 = vmatprep.subr.mxu0 0.0
    %v696 = vand.u32 %v125, 4294901760
    %697 = vmatpush1.msra.mxu0 %v696
    %698 = vmatprep.subr.mxu0 0.0
    %v699 = vand.u32 %v156, 4294901760
    %700 = vmatpush2.msra.mxu0 %v699
    %701 = vmatprep.subr.mxu0 0.0
    %v702 = vand.u32 %v155, 4294901760
    %703 = vmatpush2.msra.mxu0 %v702
    %704 = vmatprep.subr.mxu0 0.0
    %v705 = vand.u32 %v154, 4294901760
    %706 = vmatpush2.msra.mxu0 %v705
    %707 = vmatprep.subr.mxu0 0.0
    %v708 = vand.u32 %v153, 4294901760
    %709 = vmatpush2.msra.mxu0 %v708
    %710 = vmatprep.subr.mxu0 0.0
    %v711 = vand.u32 %v152, 4294901760
    %712 = vmatpush2.msra.mxu0 %v711
    %713 = vmatprep.subr.mxu0 0.0
    %v714 = vand.u32 %v151, 4294901760
    %715 = vmatpush2.msra.mxu0 %v714
    %716 = vmatprep.subr.mxu0 0.0
    %v717 = vand.u32 %v150, 4294901760
    %718 = vmatpush2.msra.mxu0 %v717
    %719 = vmatprep.subr.mxu0 0.0
    %v720 = vand.u32 %v149, 4294901760
    %721 = vmatpush2.msra.mxu0 %v720
    %722 = vmatprep.subr.mxu0 0.0
    %v723 = vand.u32 %v148, 4294901760
    %724 = vmatpush2.msra.mxu0 %v723
    %725 = vmatprep.subr.mxu0 0.0
    %v726 = vand.u32 %v147, 4294901760
    %727 = vmatpush2.msra.mxu0 %v726
    %728 = vmatprep.subr.mxu0 0.0
    %v729 = vand.u32 %v146, 4294901760
    %730 = vmatpush2.msra.mxu0 %v729
    %731 = vmatprep.subr.mxu0 0.0
    %v732 = vand.u32 %v145, 4294901760
    %733 = vmatpush2.msra.mxu0 %v732
    %734 = vmatprep.subr.mxu0 0.0
    %v735 = vand.u32 %v144, 4294901760
    %736 = vmatpush2.msra.mxu0 %v735
    %737 = vmatprep.subr.mxu0 0.0
    %v738 = vand.u32 %v143, 4294901760
    %739 = vmatpush2.msra.mxu0 %v738
    %740 = vmatprep.subr.mxu0 0.0
    %v741 = vand.u32 %v142, 4294901760
    %742 = vmatpush2.msra.mxu0 %v741
    %743 = vmatprep.subr.mxu0 0.0
    %v744 = vand.u32 %v141, 4294901760
    %745 = vmatpush2.msra.mxu0 %v744
    %v746 = vand.u32 %v165, 4294901760
    %v747 = vsub.f32 %v165, %v746
    %v748 = vand.u32 %v747, 4294901760
    %749 = vmatprep.mubr.f32.mxu0 %v748
    %v750 = vand.u32 %v161, 4294901760
    %v751 = vsub.f32 %v161, %v750
    %v752 = vand.u32 %v751, 4294901760
    %753 = vmatmul.mubr.f32.gmra.mxu0 %v752
    %v754 = vpop.f32.mrf.mxu0
    %v755 = vadd.f32 %v647, %v754
    %v756 = vpop.f32.mrf.mxu0
    %757 = vdwg.mxu0
    %758 = vmatprep.subr.mxu0 0.0
    %v759 = vand.u32 %v140, 4294901760
    %v760 = vsub.f32 %v140, %v759
    %v761 = vand.u32 %v760, 4294901760
    %762 = vmatpush1.msra.mxu0 %v761
    %763 = vmatprep.subr.mxu0 0.0
    %v764 = vand.u32 %v139, 4294901760
    %v765 = vsub.f32 %v139, %v764
    %v766 = vand.u32 %v765, 4294901760
    %767 = vmatpush1.msra.mxu0 %v766
    %768 = vmatprep.subr.mxu0 0.0
    %v769 = vand.u32 %v138, 4294901760
    %v770 = vsub.f32 %v138, %v769
    %v771 = vand.u32 %v770, 4294901760
    %772 = vmatpush1.msra.mxu0 %v771
    %773 = vmatprep.subr.mxu0 0.0
    %v774 = vand.u32 %v137, 4294901760
    %v775 = vsub.f32 %v137, %v774
    %v776 = vand.u32 %v775, 4294901760
    %777 = vmatpush1.msra.mxu0 %v776
    %778 = vmatprep.subr.mxu0 0.0
    %v779 = vand.u32 %v136, 4294901760
    %v780 = vsub.f32 %v136, %v779
    %v781 = vand.u32 %v780, 4294901760
    %782 = vmatpush1.msra.mxu0 %v781
    %783 = vmatprep.subr.mxu0 0.0
    %v784 = vand.u32 %v135, 4294901760
    %v785 = vsub.f32 %v135, %v784
    %v786 = vand.u32 %v785, 4294901760
    %787 = vmatpush1.msra.mxu0 %v786
    %788 = vmatprep.subr.mxu0 0.0
    %v789 = vand.u32 %v134, 4294901760
    %v790 = vsub.f32 %v134, %v789
    %v791 = vand.u32 %v790, 4294901760
    %792 = vmatpush1.msra.mxu0 %v791
    %793 = vmatprep.subr.mxu0 0.0
    %v794 = vand.u32 %v133, 4294901760
    %v795 = vsub.f32 %v133, %v794
    %v796 = vand.u32 %v795, 4294901760
    %797 = vmatpush1.msra.mxu0 %v796
    %798 = vmatprep.subr.mxu0 0.0
    %v799 = vand.u32 %v132, 4294901760
    %v800 = vsub.f32 %v132, %v799
    %v801 = vand.u32 %v800, 4294901760
    %802 = vmatpush1.msra.mxu0 %v801
    %803 = vmatprep.subr.mxu0 0.0
    %v804 = vand.u32 %v131, 4294901760
    %v805 = vsub.f32 %v131, %v804
    %v806 = vand.u32 %v805, 4294901760
    %807 = vmatpush1.msra.mxu0 %v806
    %808 = vmatprep.subr.mxu0 0.0
    %v809 = vand.u32 %v130, 4294901760
    %v810 = vsub.f32 %v130, %v809
    %v811 = vand.u32 %v810, 4294901760
    %812 = vmatpush1.msra.mxu0 %v811
    %813 = vmatprep.subr.mxu0 0.0
    %v814 = vand.u32 %v129, 4294901760
    %v815 = vsub.f32 %v129, %v814
    %v816 = vand.u32 %v815, 4294901760
    %817 = vmatpush1.msra.mxu0 %v816
    %818 = vmatprep.subr.mxu0 0.0
    %v819 = vand.u32 %v128, 4294901760
    %v820 = vsub.f32 %v128, %v819
    %v821 = vand.u32 %v820, 4294901760
    %822 = vmatpush1.msra.mxu0 %v821
    %823 = vmatprep.subr.mxu0 0.0
    %v824 = vand.u32 %v127, 4294901760
    %v825 = vsub.f32 %v127, %v824
    %v826 = vand.u32 %v825, 4294901760
    %827 = vmatpush1.msra.mxu0 %v826
    %828 = vmatprep.subr.mxu0 0.0
    %v829 = vand.u32 %v126, 4294901760
    %v830 = vsub.f32 %v126, %v829
    %v831 = vand.u32 %v830, 4294901760
    %832 = vmatpush1.msra.mxu0 %v831
    %833 = vmatprep.subr.mxu0 0.0
    %v834 = vand.u32 %v125, 4294901760
    %v835 = vsub.f32 %v125, %v834
    %v836 = vand.u32 %v835, 4294901760
    %837 = vmatpush1.msra.mxu0 %v836
    %838 = vmatprep.subr.mxu0 0.0
    %v839 = vand.u32 %v156, 4294901760
    %v840 = vsub.f32 %v156, %v839
    %v841 = vand.u32 %v840, 4294901760
    %842 = vmatpush2.msra.mxu0 %v841
    %843 = vmatprep.subr.mxu0 0.0
    %v844 = vand.u32 %v155, 4294901760
    %v845 = vsub.f32 %v155, %v844
    %v846 = vand.u32 %v845, 4294901760
    %847 = vmatpush2.msra.mxu0 %v846
    %848 = vmatprep.subr.mxu0 0.0
    %v849 = vand.u32 %v154, 4294901760
    %v850 = vsub.f32 %v154, %v849
    %v851 = vand.u32 %v850, 4294901760
    %852 = vmatpush2.msra.mxu0 %v851
    %853 = vmatprep.subr.mxu0 0.0
    %v854 = vand.u32 %v153, 4294901760
    %v855 = vsub.f32 %v153, %v854
    %v856 = vand.u32 %v855, 4294901760
    %857 = vmatpush2.msra.mxu0 %v856
    %858 = vmatprep.subr.mxu0 0.0
    %v859 = vand.u32 %v152, 4294901760
    %v860 = vsub.f32 %v152, %v859
    %v861 = vand.u32 %v860, 4294901760
    %862 = vmatpush2.msra.mxu0 %v861
    %863 = vmatprep.subr.mxu0 0.0
    %v864 = vand.u32 %v151, 4294901760
    %v865 = vsub.f32 %v151, %v864
    %v866 = vand.u32 %v865, 4294901760
    %867 = vmatpush2.msra.mxu0 %v866
    %868 = vmatprep.subr.mxu0 0.0
    %v869 = vand.u32 %v150, 4294901760
    %v870 = vsub.f32 %v150, %v869
    %v871 = vand.u32 %v870, 4294901760
    %872 = vmatpush2.msra.mxu0 %v871
    %873 = vmatprep.subr.mxu0 0.0
    %v874 = vand.u32 %v149, 4294901760
    %v875 = vsub.f32 %v149, %v874
    %v876 = vand.u32 %v875, 4294901760
    %877 = vmatpush2.msra.mxu0 %v876
    %878 = vmatprep.subr.mxu0 0.0
    %v879 = vand.u32 %v148, 4294901760
    %v880 = vsub.f32 %v148, %v879
    %v881 = vand.u32 %v880, 4294901760
    %882 = vmatpush2.msra.mxu0 %v881
    %883 = vmatprep.subr.mxu0 0.0
    %v884 = vand.u32 %v147, 4294901760
    %v885 = vsub.f32 %v147, %v884
    %v886 = vand.u32 %v885, 4294901760
    %887 = vmatpush2.msra.mxu0 %v886
    %888 = vmatprep.subr.mxu0 0.0
    %v889 = vand.u32 %v146, 4294901760
    %v890 = vsub.f32 %v146, %v889
    %v891 = vand.u32 %v890, 4294901760
    %892 = vmatpush2.msra.mxu0 %v891
    %893 = vmatprep.subr.mxu0 0.0
    %v894 = vand.u32 %v145, 4294901760
    %v895 = vsub.f32 %v145, %v894
    %v896 = vand.u32 %v895, 4294901760
    %897 = vmatpush2.msra.mxu0 %v896
    %898 = vmatprep.subr.mxu0 0.0
    %v899 = vand.u32 %v144, 4294901760
    %v900 = vsub.f32 %v144, %v899
    %v901 = vand.u32 %v900, 4294901760
    %902 = vmatpush2.msra.mxu0 %v901
    %903 = vmatprep.subr.mxu0 0.0
    %v904 = vand.u32 %v143, 4294901760
    %v905 = vsub.f32 %v143, %v904
    %v906 = vand.u32 %v905, 4294901760
    %907 = vmatpush2.msra.mxu0 %v906
    %908 = vmatprep.subr.mxu0 0.0
    %v909 = vand.u32 %v142, 4294901760
    %v910 = vsub.f32 %v142, %v909
    %v911 = vand.u32 %v910, 4294901760
    %912 = vmatpush2.msra.mxu0 %v911
    %913 = vmatprep.subr.mxu0 0.0
    %v914 = vand.u32 %v141, 4294901760
    %v915 = vsub.f32 %v141, %v914
    %v916 = vand.u32 %v915, 4294901760
    %917 = vmatpush2.msra.mxu0 %v916
    %v918 = vand.u32 %v165, 4294901760
    %919 = vmatprep.mubr.f32.mxu0 %v918
    %v920 = vand.u32 %v161, 4294901760
    %921 = vmatmul.mubr.f32.gmra.mxu0 %v920
    %v922 = vpop.f32.mrf.mxu0
    %v923 = vadd.f32 %v755, %v922
    %v924 = vpop.f32.mrf.mxu0
    %925 = vdwg.mxu0
    %926 = vmatprep.subr.mxu0 0.0
    %v927 = vand.u32 %v140, 4294901760
    %928 = vmatpush1.msra.mxu0 %v927
    %929 = vmatprep.subr.mxu0 0.0
    %v930 = vand.u32 %v139, 4294901760
    %931 = vmatpush1.msra.mxu0 %v930
    %932 = vmatprep.subr.mxu0 0.0
    %v933 = vand.u32 %v138, 4294901760
    %934 = vmatpush1.msra.mxu0 %v933
    %935 = vmatprep.subr.mxu0 0.0
    %v936 = vand.u32 %v137, 4294901760
    %937 = vmatpush1.msra.mxu0 %v936
    %938 = vmatprep.subr.mxu0 0.0
    %v939 = vand.u32 %v136, 4294901760
    %940 = vmatpush1.msra.mxu0 %v939
    %941 = vmatprep.subr.mxu0 0.0
    %v942 = vand.u32 %v135, 4294901760
    %943 = vmatpush1.msra.mxu0 %v942
    %944 = vmatprep.subr.mxu0 0.0
    %v945 = vand.u32 %v134, 4294901760
    %946 = vmatpush1.msra.mxu0 %v945
    %947 = vmatprep.subr.mxu0 0.0
    %v948 = vand.u32 %v133, 4294901760
    %949 = vmatpush1.msra.mxu0 %v948
    %950 = vmatprep.subr.mxu0 0.0
    %v951 = vand.u32 %v132, 4294901760
    %952 = vmatpush1.msra.mxu0 %v951
    %953 = vmatprep.subr.mxu0 0.0
    %v954 = vand.u32 %v131, 4294901760
    %955 = vmatpush1.msra.mxu0 %v954
    %956 = vmatprep.subr.mxu0 0.0
    %v957 = vand.u32 %v130, 4294901760
    %958 = vmatpush1.msra.mxu0 %v957
    %959 = vmatprep.subr.mxu0 0.0
    %v960 = vand.u32 %v129, 4294901760
    %961 = vmatpush1.msra.mxu0 %v960
    %962 = vmatprep.subr.mxu0 0.0
    %v963 = vand.u32 %v128, 4294901760
    %964 = vmatpush1.msra.mxu0 %v963
    %965 = vmatprep.subr.mxu0 0.0
    %v966 = vand.u32 %v127, 4294901760
    %967 = vmatpush1.msra.mxu0 %v966
    %968 = vmatprep.subr.mxu0 0.0
    %v969 = vand.u32 %v126, 4294901760
    %970 = vmatpush1.msra.mxu0 %v969
    %971 = vmatprep.subr.mxu0 0.0
    %v972 = vand.u32 %v125, 4294901760
    %973 = vmatpush1.msra.mxu0 %v972
    %974 = vmatprep.subr.mxu0 0.0
    %v975 = vand.u32 %v156, 4294901760
    %976 = vmatpush2.msra.mxu0 %v975
    %977 = vmatprep.subr.mxu0 0.0
    %v978 = vand.u32 %v155, 4294901760
    %979 = vmatpush2.msra.mxu0 %v978
    %980 = vmatprep.subr.mxu0 0.0
    %v981 = vand.u32 %v154, 4294901760
    %982 = vmatpush2.msra.mxu0 %v981
    %983 = vmatprep.subr.mxu0 0.0
    %v984 = vand.u32 %v153, 4294901760
    %985 = vmatpush2.msra.mxu0 %v984
    %986 = vmatprep.subr.mxu0 0.0
    %v987 = vand.u32 %v152, 4294901760
    %988 = vmatpush2.msra.mxu0 %v987
    %989 = vmatprep.subr.mxu0 0.0
    %v990 = vand.u32 %v151, 4294901760
    %991 = vmatpush2.msra.mxu0 %v990
    %992 = vmatprep.subr.mxu0 0.0
    %v993 = vand.u32 %v150, 4294901760
    %994 = vmatpush2.msra.mxu0 %v993
    %995 = vmatprep.subr.mxu0 0.0
    %v996 = vand.u32 %v149, 4294901760
    %997 = vmatpush2.msra.mxu0 %v996
    %998 = vmatprep.subr.mxu0 0.0
    %v999 = vand.u32 %v148, 4294901760
    %1000 = vmatpush2.msra.mxu0 %v999
    %1001 = vmatprep.subr.mxu0 0.0
    %v1002 = vand.u32 %v147, 4294901760
    %1003 = vmatpush2.msra.mxu0 %v1002
    %1004 = vmatprep.subr.mxu0 0.0
    %v1005 = vand.u32 %v146, 4294901760
    %1006 = vmatpush2.msra.mxu0 %v1005
    %1007 = vmatprep.subr.mxu0 0.0
    %v1008 = vand.u32 %v145, 4294901760
    %1009 = vmatpush2.msra.mxu0 %v1008
    %1010 = vmatprep.subr.mxu0 0.0
    %v1011 = vand.u32 %v144, 4294901760
    %1012 = vmatpush2.msra.mxu0 %v1011
    %1013 = vmatprep.subr.mxu0 0.0
    %v1014 = vand.u32 %v143, 4294901760
    %1015 = vmatpush2.msra.mxu0 %v1014
    %1016 = vmatprep.subr.mxu0 0.0
    %v1017 = vand.u32 %v142, 4294901760
    %1018 = vmatpush2.msra.mxu0 %v1017
    %1019 = vmatprep.subr.mxu0 0.0
    %v1020 = vand.u32 %v141, 4294901760
    %1021 = vmatpush2.msra.mxu0 %v1020
    %v1022 = vand.u32 %v165, 4294901760
    %1023 = vmatprep.mubr.f32.mxu0 %v1022
    %v1024 = vand.u32 %v161, 4294901760
    %1025 = vmatmul.mubr.f32.gmra.mxu0 %v1024
    %v1026 = vpop.f32.mrf.mxu0
    %v1027 = vadd.f32 %v923, %v1026
    %v1028 = vpop.f32.mrf.mxu0
    %1029 = vdwg.mxu0
    %v1031 = vlaneseq
    %v1032 = vshrl.u32 %v1031, 7
    %v1033 = vsub.s32 0, %v1032
    %v1034 = vrot.slane %v59, %v1033
    %v1035 = vlaneseq
    %v1036 = vshrl.u32 %v1035, 7
    %v1037 = vsub.s32 1, %v1036
    %v1038 = vrot.slane %v59, %v1037
    %v1039 = vlaneseq
    %v1040 = vshrl.u32 %v1039, 7
    %v1041 = vsub.s32 2, %v1040
    %v1042 = vrot.slane %v59, %v1041
    %v1043 = vlaneseq
    %v1044 = vshrl.u32 %v1043, 7
    %v1045 = vsub.s32 3, %v1044
    %v1046 = vrot.slane %v59, %v1045
    %1051 = vmatprep.subr.mxu0 0.0
    %v1052 = vand.u32 %v75, 4294901760
    %1053 = vmatpush1.msra.mxu0 %v1052
    %1054 = vmatprep.subr.mxu0 0.0
    %v1055 = vand.u32 %v74, 4294901760
    %1056 = vmatpush1.msra.mxu0 %v1055
    %1057 = vmatprep.subr.mxu0 0.0
    %v1058 = vand.u32 %v73, 4294901760
    %1059 = vmatpush1.msra.mxu0 %v1058
    %1060 = vmatprep.subr.mxu0 0.0
    %v1061 = vand.u32 %v72, 4294901760
    %1062 = vmatpush1.msra.mxu0 %v1061
    %1063 = vmatprep.subr.mxu0 0.0
    %v1064 = vand.u32 %v71, 4294901760
    %1065 = vmatpush1.msra.mxu0 %v1064
    %1066 = vmatprep.subr.mxu0 0.0
    %v1067 = vand.u32 %v70, 4294901760
    %1068 = vmatpush1.msra.mxu0 %v1067
    %1069 = vmatprep.subr.mxu0 0.0
    %v1070 = vand.u32 %v69, 4294901760
    %1071 = vmatpush1.msra.mxu0 %v1070
    %1072 = vmatprep.subr.mxu0 0.0
    %v1073 = vand.u32 %v68, 4294901760
    %1074 = vmatpush1.msra.mxu0 %v1073
    %1075 = vmatprep.subr.mxu0 0.0
    %v1076 = vand.u32 %v67, 4294901760
    %1077 = vmatpush1.msra.mxu0 %v1076
    %1078 = vmatprep.subr.mxu0 0.0
    %v1079 = vand.u32 %v66, 4294901760
    %1080 = vmatpush1.msra.mxu0 %v1079
    %1081 = vmatprep.subr.mxu0 0.0
    %v1082 = vand.u32 %v65, 4294901760
    %1083 = vmatpush1.msra.mxu0 %v1082
    %1084 = vmatprep.subr.mxu0 0.0
    %v1085 = vand.u32 %v64, 4294901760
    %1086 = vmatpush1.msra.mxu0 %v1085
    %1087 = vmatprep.subr.mxu0 0.0
    %v1088 = vand.u32 %v63, 4294901760
    %1089 = vmatpush1.msra.mxu0 %v1088
    %1090 = vmatprep.subr.mxu0 0.0
    %v1091 = vand.u32 %v62, 4294901760
    %1092 = vmatpush1.msra.mxu0 %v1091
    %1093 = vmatprep.subr.mxu0 0.0
    %v1094 = vand.u32 %v61, 4294901760
    %1095 = vmatpush1.msra.mxu0 %v1094
    %1096 = vmatprep.subr.mxu0 0.0
    %v1097 = vand.u32 %v60, 4294901760
    %1098 = vmatpush1.msra.mxu0 %v1097
    %1099 = vmatprep.subr.mxu0 0.0
    %v1100 = vand.u32 %v91, 4294901760
    %1101 = vmatpush2.msra.mxu0 %v1100
    %1102 = vmatprep.subr.mxu0 0.0
    %v1103 = vand.u32 %v90, 4294901760
    %1104 = vmatpush2.msra.mxu0 %v1103
    %1105 = vmatprep.subr.mxu0 0.0
    %v1106 = vand.u32 %v89, 4294901760
    %1107 = vmatpush2.msra.mxu0 %v1106
    %1108 = vmatprep.subr.mxu0 0.0
    %v1109 = vand.u32 %v88, 4294901760
    %1110 = vmatpush2.msra.mxu0 %v1109
    %1111 = vmatprep.subr.mxu0 0.0
    %v1112 = vand.u32 %v87, 4294901760
    %1113 = vmatpush2.msra.mxu0 %v1112
    %1114 = vmatprep.subr.mxu0 0.0
    %v1115 = vand.u32 %v86, 4294901760
    %1116 = vmatpush2.msra.mxu0 %v1115
    %1117 = vmatprep.subr.mxu0 0.0
    %v1118 = vand.u32 %v85, 4294901760
    %1119 = vmatpush2.msra.mxu0 %v1118
    %1120 = vmatprep.subr.mxu0 0.0
    %v1121 = vand.u32 %v84, 4294901760
    %1122 = vmatpush2.msra.mxu0 %v1121
    %1123 = vmatprep.subr.mxu0 0.0
    %v1124 = vand.u32 %v83, 4294901760
    %1125 = vmatpush2.msra.mxu0 %v1124
    %1126 = vmatprep.subr.mxu0 0.0
    %v1127 = vand.u32 %v82, 4294901760
    %1128 = vmatpush2.msra.mxu0 %v1127
    %1129 = vmatprep.subr.mxu0 0.0
    %v1130 = vand.u32 %v81, 4294901760
    %1131 = vmatpush2.msra.mxu0 %v1130
    %1132 = vmatprep.subr.mxu0 0.0
    %v1133 = vand.u32 %v80, 4294901760
    %1134 = vmatpush2.msra.mxu0 %v1133
    %1135 = vmatprep.subr.mxu0 0.0
    %v1136 = vand.u32 %v79, 4294901760
    %1137 = vmatpush2.msra.mxu0 %v1136
    %1138 = vmatprep.subr.mxu0 0.0
    %v1139 = vand.u32 %v78, 4294901760
    %1140 = vmatpush2.msra.mxu0 %v1139
    %1141 = vmatprep.subr.mxu0 0.0
    %v1142 = vand.u32 %v77, 4294901760
    %1143 = vmatpush2.msra.mxu0 %v1142
    %1144 = vmatprep.subr.mxu0 0.0
    %v1145 = vand.u32 %v76, 4294901760
    %1146 = vmatpush2.msra.mxu0 %v1145
    %v1147 = vand.u32 %v1038, 4294901760
    %v1148 = vsub.f32 %v1038, %v1147
    %v1149 = vand.u32 %v1148, 4294901760
    %v1150 = vsub.f32 %v1148, %v1149
    %v1151 = vand.u32 %v1150, 4294901760
    %1152 = vmatprep.mubr.f32.mxu0 %v1151
    %v1153 = vand.u32 %v1034, 4294901760
    %v1154 = vsub.f32 %v1034, %v1153
    %v1155 = vand.u32 %v1154, 4294901760
    %v1156 = vsub.f32 %v1154, %v1155
    %v1157 = vand.u32 %v1156, 4294901760
    %1158 = vmatmul.mubr.f32.gmra.mxu0 %v1157
    %v1159 = vpop.f32.mrf.mxu0
    %v1160 = vadd.f32 %v1027, %v1159
    %v1161 = vpop.f32.mrf.mxu0
    %1162 = vdwg.mxu0
    %1163 = vmatprep.subr.mxu0 0.0
    %v1164 = vand.u32 %v75, 4294901760
    %v1165 = vsub.f32 %v75, %v1164
    %v1166 = vand.u32 %v1165, 4294901760
    %v1167 = vsub.f32 %v1165, %v1166
    %v1168 = vand.u32 %v1167, 4294901760
    %1169 = vmatpush1.msra.mxu0 %v1168
    %1170 = vmatprep.subr.mxu0 0.0
    %v1171 = vand.u32 %v74, 4294901760
    %v1172 = vsub.f32 %v74, %v1171
    %v1173 = vand.u32 %v1172, 4294901760
    %v1174 = vsub.f32 %v1172, %v1173
    %v1175 = vand.u32 %v1174, 4294901760
    %1176 = vmatpush1.msra.mxu0 %v1175
    %1177 = vmatprep.subr.mxu0 0.0
    %v1178 = vand.u32 %v73, 4294901760
    %v1179 = vsub.f32 %v73, %v1178
    %v1180 = vand.u32 %v1179, 4294901760
    %v1181 = vsub.f32 %v1179, %v1180
    %v1182 = vand.u32 %v1181, 4294901760
    %1183 = vmatpush1.msra.mxu0 %v1182
    %1184 = vmatprep.subr.mxu0 0.0
    %v1185 = vand.u32 %v72, 4294901760
    %v1186 = vsub.f32 %v72, %v1185
    %v1187 = vand.u32 %v1186, 4294901760
    %v1188 = vsub.f32 %v1186, %v1187
    %v1189 = vand.u32 %v1188, 4294901760
    %1190 = vmatpush1.msra.mxu0 %v1189
    %1191 = vmatprep.subr.mxu0 0.0
    %v1192 = vand.u32 %v71, 4294901760
    %v1193 = vsub.f32 %v71, %v1192
    %v1194 = vand.u32 %v1193, 4294901760
    %v1195 = vsub.f32 %v1193, %v1194
    %v1196 = vand.u32 %v1195, 4294901760
    %1197 = vmatpush1.msra.mxu0 %v1196
    %1198 = vmatprep.subr.mxu0 0.0
    %v1199 = vand.u32 %v70, 4294901760
    %v1200 = vsub.f32 %v70, %v1199
    %v1201 = vand.u32 %v1200, 4294901760
    %v1202 = vsub.f32 %v1200, %v1201
    %v1203 = vand.u32 %v1202, 4294901760
    %1204 = vmatpush1.msra.mxu0 %v1203
    %1205 = vmatprep.subr.mxu0 0.0
    %v1206 = vand.u32 %v69, 4294901760
    %v1207 = vsub.f32 %v69, %v1206
    %v1208 = vand.u32 %v1207, 4294901760
    %v1209 = vsub.f32 %v1207, %v1208
    %v1210 = vand.u32 %v1209, 4294901760
    %1211 = vmatpush1.msra.mxu0 %v1210
    %1212 = vmatprep.subr.mxu0 0.0
    %v1213 = vand.u32 %v68, 4294901760
    %v1214 = vsub.f32 %v68, %v1213
    %v1215 = vand.u32 %v1214, 4294901760
    %v1216 = vsub.f32 %v1214, %v1215
    %v1217 = vand.u32 %v1216, 4294901760
    %1218 = vmatpush1.msra.mxu0 %v1217
    %1219 = vmatprep.subr.mxu0 0.0
    %v1220 = vand.u32 %v67, 4294901760
    %v1221 = vsub.f32 %v67, %v1220
    %v1222 = vand.u32 %v1221, 4294901760
    %v1223 = vsub.f32 %v1221, %v1222
    %v1224 = vand.u32 %v1223, 4294901760
    %1225 = vmatpush1.msra.mxu0 %v1224
    %1226 = vmatprep.subr.mxu0 0.0
    %v1227 = vand.u32 %v66, 4294901760
    %v1228 = vsub.f32 %v66, %v1227
    %v1229 = vand.u32 %v1228, 4294901760
    %v1230 = vsub.f32 %v1228, %v1229
    %v1231 = vand.u32 %v1230, 4294901760
    %1232 = vmatpush1.msra.mxu0 %v1231
    %1233 = vmatprep.subr.mxu0 0.0
    %v1234 = vand.u32 %v65, 4294901760
    %v1235 = vsub.f32 %v65, %v1234
    %v1236 = vand.u32 %v1235, 4294901760
    %v1237 = vsub.f32 %v1235, %v1236
    %v1238 = vand.u32 %v1237, 4294901760
    %1239 = vmatpush1.msra.mxu0 %v1238
    %1240 = vmatprep.subr.mxu0 0.0
    %v1241 = vand.u32 %v64, 4294901760
    %v1242 = vsub.f32 %v64, %v1241
    %v1243 = vand.u32 %v1242, 4294901760
    %v1244 = vsub.f32 %v1242, %v1243
    %v1245 = vand.u32 %v1244, 4294901760
    %1246 = vmatpush1.msra.mxu0 %v1245
    %1247 = vmatprep.subr.mxu0 0.0
    %v1248 = vand.u32 %v63, 4294901760
    %v1249 = vsub.f32 %v63, %v1248
    %v1250 = vand.u32 %v1249, 4294901760
    %v1251 = vsub.f32 %v1249, %v1250
    %v1252 = vand.u32 %v1251, 4294901760
    %1253 = vmatpush1.msra.mxu0 %v1252
    %1254 = vmatprep.subr.mxu0 0.0
    %v1255 = vand.u32 %v62, 4294901760
    %v1256 = vsub.f32 %v62, %v1255
    %v1257 = vand.u32 %v1256, 4294901760
    %v1258 = vsub.f32 %v1256, %v1257
    %v1259 = vand.u32 %v1258, 4294901760
    %1260 = vmatpush1.msra.mxu0 %v1259
    %1261 = vmatprep.subr.mxu0 0.0
    %v1262 = vand.u32 %v61, 4294901760
    %v1263 = vsub.f32 %v61, %v1262
    %v1264 = vand.u32 %v1263, 4294901760
    %v1265 = vsub.f32 %v1263, %v1264
    %v1266 = vand.u32 %v1265, 4294901760
    %1267 = vmatpush1.msra.mxu0 %v1266
    %1268 = vmatprep.subr.mxu0 0.0
    %v1269 = vand.u32 %v60, 4294901760
    %v1270 = vsub.f32 %v60, %v1269
    %v1271 = vand.u32 %v1270, 4294901760
    %v1272 = vsub.f32 %v1270, %v1271
    %v1273 = vand.u32 %v1272, 4294901760
    %1274 = vmatpush1.msra.mxu0 %v1273
    %1275 = vmatprep.subr.mxu0 0.0
    %v1276 = vand.u32 %v91, 4294901760
    %v1277 = vsub.f32 %v91, %v1276
    %v1278 = vand.u32 %v1277, 4294901760
    %v1279 = vsub.f32 %v1277, %v1278
    %v1280 = vand.u32 %v1279, 4294901760
    %1281 = vmatpush2.msra.mxu0 %v1280
    %1282 = vmatprep.subr.mxu0 0.0
    %v1283 = vand.u32 %v90, 4294901760
    %v1284 = vsub.f32 %v90, %v1283
    %v1285 = vand.u32 %v1284, 4294901760
    %v1286 = vsub.f32 %v1284, %v1285
    %v1287 = vand.u32 %v1286, 4294901760
    %1288 = vmatpush2.msra.mxu0 %v1287
    %1289 = vmatprep.subr.mxu0 0.0
    %v1290 = vand.u32 %v89, 4294901760
    %v1291 = vsub.f32 %v89, %v1290
    %v1292 = vand.u32 %v1291, 4294901760
    %v1293 = vsub.f32 %v1291, %v1292
    %v1294 = vand.u32 %v1293, 4294901760
    %1295 = vmatpush2.msra.mxu0 %v1294
    %1296 = vmatprep.subr.mxu0 0.0
    %v1297 = vand.u32 %v88, 4294901760
    %v1298 = vsub.f32 %v88, %v1297
    %v1299 = vand.u32 %v1298, 4294901760
    %v1300 = vsub.f32 %v1298, %v1299
    %v1301 = vand.u32 %v1300, 4294901760
    %1302 = vmatpush2.msra.mxu0 %v1301
    %1303 = vmatprep.subr.mxu0 0.0
    %v1304 = vand.u32 %v87, 4294901760
    %v1305 = vsub.f32 %v87, %v1304
    %v1306 = vand.u32 %v1305, 4294901760
    %v1307 = vsub.f32 %v1305, %v1306
    %v1308 = vand.u32 %v1307, 4294901760
    %1309 = vmatpush2.msra.mxu0 %v1308
    %1310 = vmatprep.subr.mxu0 0.0
    %v1311 = vand.u32 %v86, 4294901760
    %v1312 = vsub.f32 %v86, %v1311
    %v1313 = vand.u32 %v1312, 4294901760
    %v1314 = vsub.f32 %v1312, %v1313
    %v1315 = vand.u32 %v1314, 4294901760
    %1316 = vmatpush2.msra.mxu0 %v1315
    %1317 = vmatprep.subr.mxu0 0.0
    %v1318 = vand.u32 %v85, 4294901760
    %v1319 = vsub.f32 %v85, %v1318
    %v1320 = vand.u32 %v1319, 4294901760
    %v1321 = vsub.f32 %v1319, %v1320
    %v1322 = vand.u32 %v1321, 4294901760
    %1323 = vmatpush2.msra.mxu0 %v1322
    %1324 = vmatprep.subr.mxu0 0.0
    %v1325 = vand.u32 %v84, 4294901760
    %v1326 = vsub.f32 %v84, %v1325
    %v1327 = vand.u32 %v1326, 4294901760
    %v1328 = vsub.f32 %v1326, %v1327
    %v1329 = vand.u32 %v1328, 4294901760
    %1330 = vmatpush2.msra.mxu0 %v1329
    %1331 = vmatprep.subr.mxu0 0.0
    %v1332 = vand.u32 %v83, 4294901760
    %v1333 = vsub.f32 %v83, %v1332
    %v1334 = vand.u32 %v1333, 4294901760
    %v1335 = vsub.f32 %v1333, %v1334
    %v1336 = vand.u32 %v1335, 4294901760
    %1337 = vmatpush2.msra.mxu0 %v1336
    %1338 = vmatprep.subr.mxu0 0.0
    %v1339 = vand.u32 %v82, 4294901760
    %v1340 = vsub.f32 %v82, %v1339
    %v1341 = vand.u32 %v1340, 4294901760
    %v1342 = vsub.f32 %v1340, %v1341
    %v1343 = vand.u32 %v1342, 4294901760
    %1344 = vmatpush2.msra.mxu0 %v1343
    %1345 = vmatprep.subr.mxu0 0.0
    %v1346 = vand.u32 %v81, 4294901760
    %v1347 = vsub.f32 %v81, %v1346
    %v1348 = vand.u32 %v1347, 4294901760
    %v1349 = vsub.f32 %v1347, %v1348
    %v1350 = vand.u32 %v1349, 4294901760
    %1351 = vmatpush2.msra.mxu0 %v1350
    %1352 = vmatprep.subr.mxu0 0.0
    %v1353 = vand.u32 %v80, 4294901760
    %v1354 = vsub.f32 %v80, %v1353
    %v1355 = vand.u32 %v1354, 4294901760
    %v1356 = vsub.f32 %v1354, %v1355
    %v1357 = vand.u32 %v1356, 4294901760
    %1358 = vmatpush2.msra.mxu0 %v1357
    %1359 = vmatprep.subr.mxu0 0.0
    %v1360 = vand.u32 %v79, 4294901760
    %v1361 = vsub.f32 %v79, %v1360
    %v1362 = vand.u32 %v1361, 4294901760
    %v1363 = vsub.f32 %v1361, %v1362
    %v1364 = vand.u32 %v1363, 4294901760
    %1365 = vmatpush2.msra.mxu0 %v1364
    %1366 = vmatprep.subr.mxu0 0.0
    %v1367 = vand.u32 %v78, 4294901760
    %v1368 = vsub.f32 %v78, %v1367
    %v1369 = vand.u32 %v1368, 4294901760
    %v1370 = vsub.f32 %v1368, %v1369
    %v1371 = vand.u32 %v1370, 4294901760
    %1372 = vmatpush2.msra.mxu0 %v1371
    %1373 = vmatprep.subr.mxu0 0.0
    %v1374 = vand.u32 %v77, 4294901760
    %v1375 = vsub.f32 %v77, %v1374
    %v1376 = vand.u32 %v1375, 4294901760
    %v1377 = vsub.f32 %v1375, %v1376
    %v1378 = vand.u32 %v1377, 4294901760
    %1379 = vmatpush2.msra.mxu0 %v1378
    %1380 = vmatprep.subr.mxu0 0.0
    %v1381 = vand.u32 %v76, 4294901760
    %v1382 = vsub.f32 %v76, %v1381
    %v1383 = vand.u32 %v1382, 4294901760
    %v1384 = vsub.f32 %v1382, %v1383
    %v1385 = vand.u32 %v1384, 4294901760
    %1386 = vmatpush2.msra.mxu0 %v1385
    %v1387 = vand.u32 %v1038, 4294901760
    %1388 = vmatprep.mubr.f32.mxu0 %v1387
    %v1389 = vand.u32 %v1034, 4294901760
    %1390 = vmatmul.mubr.f32.gmra.mxu0 %v1389
    %v1391 = vpop.f32.mrf.mxu0
    %v1392 = vadd.f32 %v1160, %v1391
    %v1393 = vpop.f32.mrf.mxu0
    %1394 = vdwg.mxu0
    %1395 = vmatprep.subr.mxu0 0.0
    %v1396 = vand.u32 %v75, 4294901760
    %v1397 = vsub.f32 %v75, %v1396
    %1398 = vmatpush1.msra.mxu0 %v1397
    %1399 = vmatprep.subr.mxu0 0.0
    %v1400 = vand.u32 %v74, 4294901760
    %v1401 = vsub.f32 %v74, %v1400
    %1402 = vmatpush1.msra.mxu0 %v1401
    %1403 = vmatprep.subr.mxu0 0.0
    %v1404 = vand.u32 %v73, 4294901760
    %v1405 = vsub.f32 %v73, %v1404
    %1406 = vmatpush1.msra.mxu0 %v1405
    %1407 = vmatprep.subr.mxu0 0.0
    %v1408 = vand.u32 %v72, 4294901760
    %v1409 = vsub.f32 %v72, %v1408
    %1410 = vmatpush1.msra.mxu0 %v1409
    %1411 = vmatprep.subr.mxu0 0.0
    %v1412 = vand.u32 %v71, 4294901760
    %v1413 = vsub.f32 %v71, %v1412
    %1414 = vmatpush1.msra.mxu0 %v1413
    %1415 = vmatprep.subr.mxu0 0.0
    %v1416 = vand.u32 %v70, 4294901760
    %v1417 = vsub.f32 %v70, %v1416
    %1418 = vmatpush1.msra.mxu0 %v1417
    %1419 = vmatprep.subr.mxu0 0.0
    %v1420 = vand.u32 %v69, 4294901760
    %v1421 = vsub.f32 %v69, %v1420
    %1422 = vmatpush1.msra.mxu0 %v1421
    %1423 = vmatprep.subr.mxu0 0.0
    %v1424 = vand.u32 %v68, 4294901760
    %v1425 = vsub.f32 %v68, %v1424
    %1426 = vmatpush1.msra.mxu0 %v1425
    %1427 = vmatprep.subr.mxu0 0.0
    %v1428 = vand.u32 %v67, 4294901760
    %v1429 = vsub.f32 %v67, %v1428
    %1430 = vmatpush1.msra.mxu0 %v1429
    %1431 = vmatprep.subr.mxu0 0.0
    %v1432 = vand.u32 %v66, 4294901760
    %v1433 = vsub.f32 %v66, %v1432
    %1434 = vmatpush1.msra.mxu0 %v1433
    %1435 = vmatprep.subr.mxu0 0.0
    %v1436 = vand.u32 %v65, 4294901760
    %v1437 = vsub.f32 %v65, %v1436
    %1438 = vmatpush1.msra.mxu0 %v1437
    %1439 = vmatprep.subr.mxu0 0.0
    %v1440 = vand.u32 %v64, 4294901760
    %v1441 = vsub.f32 %v64, %v1440
    %1442 = vmatpush1.msra.mxu0 %v1441
    %1443 = vmatprep.subr.mxu0 0.0
    %v1444 = vand.u32 %v63, 4294901760
    %v1445 = vsub.f32 %v63, %v1444
    %1446 = vmatpush1.msra.mxu0 %v1445
    %1447 = vmatprep.subr.mxu0 0.0
    %v1448 = vand.u32 %v62, 4294901760
    %v1449 = vsub.f32 %v62, %v1448
    %1450 = vmatpush1.msra.mxu0 %v1449
    %1451 = vmatprep.subr.mxu0 0.0
    %v1452 = vand.u32 %v61, 4294901760
    %v1453 = vsub.f32 %v61, %v1452
    %1454 = vmatpush1.msra.mxu0 %v1453
    %1455 = vmatprep.subr.mxu0 0.0
    %v1456 = vand.u32 %v60, 4294901760
    %v1457 = vsub.f32 %v60, %v1456
    %1458 = vmatpush1.msra.mxu0 %v1457
    %1459 = vmatprep.subr.mxu0 0.0
    %v1460 = vand.u32 %v91, 4294901760
    %v1461 = vsub.f32 %v91, %v1460
    %1462 = vmatpush2.msra.mxu0 %v1461
    %1463 = vmatprep.subr.mxu0 0.0
    %v1464 = vand.u32 %v90, 4294901760
    %v1465 = vsub.f32 %v90, %v1464
    %1466 = vmatpush2.msra.mxu0 %v1465
    %1467 = vmatprep.subr.mxu0 0.0
    %v1468 = vand.u32 %v89, 4294901760
    %v1469 = vsub.f32 %v89, %v1468
    %1470 = vmatpush2.msra.mxu0 %v1469
    %1471 = vmatprep.subr.mxu0 0.0
    %v1472 = vand.u32 %v88, 4294901760
    %v1473 = vsub.f32 %v88, %v1472
    %1474 = vmatpush2.msra.mxu0 %v1473
    %1475 = vmatprep.subr.mxu0 0.0
    %v1476 = vand.u32 %v87, 4294901760
    %v1477 = vsub.f32 %v87, %v1476
    %1478 = vmatpush2.msra.mxu0 %v1477
    %1479 = vmatprep.subr.mxu0 0.0
    %v1480 = vand.u32 %v86, 4294901760
    %v1481 = vsub.f32 %v86, %v1480
    %1482 = vmatpush2.msra.mxu0 %v1481
    %1483 = vmatprep.subr.mxu0 0.0
    %v1484 = vand.u32 %v85, 4294901760
    %v1485 = vsub.f32 %v85, %v1484
    %1486 = vmatpush2.msra.mxu0 %v1485
    %1487 = vmatprep.subr.mxu0 0.0
    %v1488 = vand.u32 %v84, 4294901760
    %v1489 = vsub.f32 %v84, %v1488
    %1490 = vmatpush2.msra.mxu0 %v1489
    %1491 = vmatprep.subr.mxu0 0.0
    %v1492 = vand.u32 %v83, 4294901760
    %v1493 = vsub.f32 %v83, %v1492
    %1494 = vmatpush2.msra.mxu0 %v1493
    %1495 = vmatprep.subr.mxu0 0.0
    %v1496 = vand.u32 %v82, 4294901760
    %v1497 = vsub.f32 %v82, %v1496
    %1498 = vmatpush2.msra.mxu0 %v1497
    %1499 = vmatprep.subr.mxu0 0.0
    %v1500 = vand.u32 %v81, 4294901760
    %v1501 = vsub.f32 %v81, %v1500
    %1502 = vmatpush2.msra.mxu0 %v1501
    %1503 = vmatprep.subr.mxu0 0.0
    %v1504 = vand.u32 %v80, 4294901760
    %v1505 = vsub.f32 %v80, %v1504
    %1506 = vmatpush2.msra.mxu0 %v1505
    %1507 = vmatprep.subr.mxu0 0.0
    %v1508 = vand.u32 %v79, 4294901760
    %v1509 = vsub.f32 %v79, %v1508
    %1510 = vmatpush2.msra.mxu0 %v1509
    %1511 = vmatprep.subr.mxu0 0.0
    %v1512 = vand.u32 %v78, 4294901760
    %v1513 = vsub.f32 %v78, %v1512
    %1514 = vmatpush2.msra.mxu0 %v1513
    %1515 = vmatprep.subr.mxu0 0.0
    %v1516 = vand.u32 %v77, 4294901760
    %v1517 = vsub.f32 %v77, %v1516
    %1518 = vmatpush2.msra.mxu0 %v1517
    %1519 = vmatprep.subr.mxu0 0.0
    %v1520 = vand.u32 %v76, 4294901760
    %v1521 = vsub.f32 %v76, %v1520
    %1522 = vmatpush2.msra.mxu0 %v1521
    %v1523 = vand.u32 %v1038, 4294901760
    %v1524 = vsub.f32 %v1038, %v1523
    %1525 = vmatprep.mubr.f32.mxu0 %v1524
    %v1526 = vand.u32 %v1034, 4294901760
    %v1527 = vsub.f32 %v1034, %v1526
    %1528 = vmatmul.mubr.f32.gmra.mxu0 %v1527
    %v1529 = vpop.f32.mrf.mxu0
    %v1530 = vadd.f32 %v1392, %v1529
    %v1531 = vpop.f32.mrf.mxu0
    %1532 = vdwg.mxu0
    %1533 = vmatprep.subr.mxu0 0.0
    %v1534 = vand.u32 %v75, 4294901760
    %1535 = vmatpush1.msra.mxu0 %v1534
    %1536 = vmatprep.subr.mxu0 0.0
    %v1537 = vand.u32 %v74, 4294901760
    %1538 = vmatpush1.msra.mxu0 %v1537
    %1539 = vmatprep.subr.mxu0 0.0
    %v1540 = vand.u32 %v73, 4294901760
    %1541 = vmatpush1.msra.mxu0 %v1540
    %1542 = vmatprep.subr.mxu0 0.0
    %v1543 = vand.u32 %v72, 4294901760
    %1544 = vmatpush1.msra.mxu0 %v1543
    %1545 = vmatprep.subr.mxu0 0.0
    %v1546 = vand.u32 %v71, 4294901760
    %1547 = vmatpush1.msra.mxu0 %v1546
    %1548 = vmatprep.subr.mxu0 0.0
    %v1549 = vand.u32 %v70, 4294901760
    %1550 = vmatpush1.msra.mxu0 %v1549
    %1551 = vmatprep.subr.mxu0 0.0
    %v1552 = vand.u32 %v69, 4294901760
    %1553 = vmatpush1.msra.mxu0 %v1552
    %1554 = vmatprep.subr.mxu0 0.0
    %v1555 = vand.u32 %v68, 4294901760
    %1556 = vmatpush1.msra.mxu0 %v1555
    %1557 = vmatprep.subr.mxu0 0.0
    %v1558 = vand.u32 %v67, 4294901760
    %1559 = vmatpush1.msra.mxu0 %v1558
    %1560 = vmatprep.subr.mxu0 0.0
    %v1561 = vand.u32 %v66, 4294901760
    %1562 = vmatpush1.msra.mxu0 %v1561
    %1563 = vmatprep.subr.mxu0 0.0
    %v1564 = vand.u32 %v65, 4294901760
    %1565 = vmatpush1.msra.mxu0 %v1564
    %1566 = vmatprep.subr.mxu0 0.0
    %v1567 = vand.u32 %v64, 4294901760
    %1568 = vmatpush1.msra.mxu0 %v1567
    %1569 = vmatprep.subr.mxu0 0.0
    %v1570 = vand.u32 %v63, 4294901760
    %1571 = vmatpush1.msra.mxu0 %v1570
    %1572 = vmatprep.subr.mxu0 0.0
    %v1573 = vand.u32 %v62, 4294901760
    %1574 = vmatpush1.msra.mxu0 %v1573
    %1575 = vmatprep.subr.mxu0 0.0
    %v1576 = vand.u32 %v61, 4294901760
    %1577 = vmatpush1.msra.mxu0 %v1576
    %1578 = vmatprep.subr.mxu0 0.0
    %v1579 = vand.u32 %v60, 4294901760
    %1580 = vmatpush1.msra.mxu0 %v1579
    %1581 = vmatprep.subr.mxu0 0.0
    %v1582 = vand.u32 %v91, 4294901760
    %1583 = vmatpush2.msra.mxu0 %v1582
    %1584 = vmatprep.subr.mxu0 0.0
    %v1585 = vand.u32 %v90, 4294901760
    %1586 = vmatpush2.msra.mxu0 %v1585
    %1587 = vmatprep.subr.mxu0 0.0
    %v1588 = vand.u32 %v89, 4294901760
    %1589 = vmatpush2.msra.mxu0 %v1588
    %1590 = vmatprep.subr.mxu0 0.0
    %v1591 = vand.u32 %v88, 4294901760
    %1592 = vmatpush2.msra.mxu0 %v1591
    %1593 = vmatprep.subr.mxu0 0.0
    %v1594 = vand.u32 %v87, 4294901760
    %1595 = vmatpush2.msra.mxu0 %v1594
    %1596 = vmatprep.subr.mxu0 0.0
    %v1597 = vand.u32 %v86, 4294901760
    %1598 = vmatpush2.msra.mxu0 %v1597
    %1599 = vmatprep.subr.mxu0 0.0
    %v1600 = vand.u32 %v85, 4294901760
    %1601 = vmatpush2.msra.mxu0 %v1600
    %1602 = vmatprep.subr.mxu0 0.0
    %v1603 = vand.u32 %v84, 4294901760
    %1604 = vmatpush2.msra.mxu0 %v1603
    %1605 = vmatprep.subr.mxu0 0.0
    %v1606 = vand.u32 %v83, 4294901760
    %1607 = vmatpush2.msra.mxu0 %v1606
    %1608 = vmatprep.subr.mxu0 0.0
    %v1609 = vand.u32 %v82, 4294901760
    %1610 = vmatpush2.msra.mxu0 %v1609
    %1611 = vmatprep.subr.mxu0 0.0
    %v1612 = vand.u32 %v81, 4294901760
    %1613 = vmatpush2.msra.mxu0 %v1612
    %1614 = vmatprep.subr.mxu0 0.0
    %v1615 = vand.u32 %v80, 4294901760
    %1616 = vmatpush2.msra.mxu0 %v1615
    %1617 = vmatprep.subr.mxu0 0.0
    %v1618 = vand.u32 %v79, 4294901760
    %1619 = vmatpush2.msra.mxu0 %v1618
    %1620 = vmatprep.subr.mxu0 0.0
    %v1621 = vand.u32 %v78, 4294901760
    %1622 = vmatpush2.msra.mxu0 %v1621
    %1623 = vmatprep.subr.mxu0 0.0
    %v1624 = vand.u32 %v77, 4294901760
    %1625 = vmatpush2.msra.mxu0 %v1624
    %1626 = vmatprep.subr.mxu0 0.0
    %v1627 = vand.u32 %v76, 4294901760
    %1628 = vmatpush2.msra.mxu0 %v1627
    %v1629 = vand.u32 %v1038, 4294901760
    %v1630 = vsub.f32 %v1038, %v1629
    %v1631 = vand.u32 %v1630, 4294901760
    %1632 = vmatprep.mubr.f32.mxu0 %v1631
    %v1633 = vand.u32 %v1034, 4294901760
    %v1634 = vsub.f32 %v1034, %v1633
    %v1635 = vand.u32 %v1634, 4294901760
    %1636 = vmatmul.mubr.f32.gmra.mxu0 %v1635
    %v1637 = vpop.f32.mrf.mxu0
    %v1638 = vadd.f32 %v1530, %v1637
    %v1639 = vpop.f32.mrf.mxu0
    %1640 = vdwg.mxu0
    %1641 = vmatprep.subr.mxu0 0.0
    %v1642 = vand.u32 %v75, 4294901760
    %v1643 = vsub.f32 %v75, %v1642
    %v1644 = vand.u32 %v1643, 4294901760
    %1645 = vmatpush1.msra.mxu0 %v1644
    %1646 = vmatprep.subr.mxu0 0.0
    %v1647 = vand.u32 %v74, 4294901760
    %v1648 = vsub.f32 %v74, %v1647
    %v1649 = vand.u32 %v1648, 4294901760
    %1650 = vmatpush1.msra.mxu0 %v1649
    %1651 = vmatprep.subr.mxu0 0.0
    %v1652 = vand.u32 %v73, 4294901760
    %v1653 = vsub.f32 %v73, %v1652
    %v1654 = vand.u32 %v1653, 4294901760
    %1655 = vmatpush1.msra.mxu0 %v1654
    %1656 = vmatprep.subr.mxu0 0.0
    %v1657 = vand.u32 %v72, 4294901760
    %v1658 = vsub.f32 %v72, %v1657
    %v1659 = vand.u32 %v1658, 4294901760
    %1660 = vmatpush1.msra.mxu0 %v1659
    %1661 = vmatprep.subr.mxu0 0.0
    %v1662 = vand.u32 %v71, 4294901760
    %v1663 = vsub.f32 %v71, %v1662
    %v1664 = vand.u32 %v1663, 4294901760
    %1665 = vmatpush1.msra.mxu0 %v1664
    %1666 = vmatprep.subr.mxu0 0.0
    %v1667 = vand.u32 %v70, 4294901760
    %v1668 = vsub.f32 %v70, %v1667
    %v1669 = vand.u32 %v1668, 4294901760
    %1670 = vmatpush1.msra.mxu0 %v1669
    %1671 = vmatprep.subr.mxu0 0.0
    %v1672 = vand.u32 %v69, 4294901760
    %v1673 = vsub.f32 %v69, %v1672
    %v1674 = vand.u32 %v1673, 4294901760
    %1675 = vmatpush1.msra.mxu0 %v1674
    %1676 = vmatprep.subr.mxu0 0.0
    %v1677 = vand.u32 %v68, 4294901760
    %v1678 = vsub.f32 %v68, %v1677
    %v1679 = vand.u32 %v1678, 4294901760
    %1680 = vmatpush1.msra.mxu0 %v1679
    %1681 = vmatprep.subr.mxu0 0.0
    %v1682 = vand.u32 %v67, 4294901760
    %v1683 = vsub.f32 %v67, %v1682
    %v1684 = vand.u32 %v1683, 4294901760
    %1685 = vmatpush1.msra.mxu0 %v1684
    %1686 = vmatprep.subr.mxu0 0.0
    %v1687 = vand.u32 %v66, 4294901760
    %v1688 = vsub.f32 %v66, %v1687
    %v1689 = vand.u32 %v1688, 4294901760
    %1690 = vmatpush1.msra.mxu0 %v1689
    %1691 = vmatprep.subr.mxu0 0.0
    %v1692 = vand.u32 %v65, 4294901760
    %v1693 = vsub.f32 %v65, %v1692
    %v1694 = vand.u32 %v1693, 4294901760
    %1695 = vmatpush1.msra.mxu0 %v1694
    %1696 = vmatprep.subr.mxu0 0.0
    %v1697 = vand.u32 %v64, 4294901760
    %v1698 = vsub.f32 %v64, %v1697
    %v1699 = vand.u32 %v1698, 4294901760
    %1700 = vmatpush1.msra.mxu0 %v1699
    %1701 = vmatprep.subr.mxu0 0.0
    %v1702 = vand.u32 %v63, 4294901760
    %v1703 = vsub.f32 %v63, %v1702
    %v1704 = vand.u32 %v1703, 4294901760
    %1705 = vmatpush1.msra.mxu0 %v1704
    %1706 = vmatprep.subr.mxu0 0.0
    %v1707 = vand.u32 %v62, 4294901760
    %v1708 = vsub.f32 %v62, %v1707
    %v1709 = vand.u32 %v1708, 4294901760
    %1710 = vmatpush1.msra.mxu0 %v1709
    %1711 = vmatprep.subr.mxu0 0.0
    %v1712 = vand.u32 %v61, 4294901760
    %v1713 = vsub.f32 %v61, %v1712
    %v1714 = vand.u32 %v1713, 4294901760
    %1715 = vmatpush1.msra.mxu0 %v1714
    %1716 = vmatprep.subr.mxu0 0.0
    %v1717 = vand.u32 %v60, 4294901760
    %v1718 = vsub.f32 %v60, %v1717
    %v1719 = vand.u32 %v1718, 4294901760
    %1720 = vmatpush1.msra.mxu0 %v1719
    %1721 = vmatprep.subr.mxu0 0.0
    %v1722 = vand.u32 %v91, 4294901760
    %v1723 = vsub.f32 %v91, %v1722
    %v1724 = vand.u32 %v1723, 4294901760
    %1725 = vmatpush2.msra.mxu0 %v1724
    %1726 = vmatprep.subr.mxu0 0.0
    %v1727 = vand.u32 %v90, 4294901760
    %v1728 = vsub.f32 %v90, %v1727
    %v1729 = vand.u32 %v1728, 4294901760
    %1730 = vmatpush2.msra.mxu0 %v1729
    %1731 = vmatprep.subr.mxu0 0.0
    %v1732 = vand.u32 %v89, 4294901760
    %v1733 = vsub.f32 %v89, %v1732
    %v1734 = vand.u32 %v1733, 4294901760
    %1735 = vmatpush2.msra.mxu0 %v1734
    %1736 = vmatprep.subr.mxu0 0.0
    %v1737 = vand.u32 %v88, 4294901760
    %v1738 = vsub.f32 %v88, %v1737
    %v1739 = vand.u32 %v1738, 4294901760
    %1740 = vmatpush2.msra.mxu0 %v1739
    %1741 = vmatprep.subr.mxu0 0.0
    %v1742 = vand.u32 %v87, 4294901760
    %v1743 = vsub.f32 %v87, %v1742
    %v1744 = vand.u32 %v1743, 4294901760
    %1745 = vmatpush2.msra.mxu0 %v1744
    %1746 = vmatprep.subr.mxu0 0.0
    %v1747 = vand.u32 %v86, 4294901760
    %v1748 = vsub.f32 %v86, %v1747
    %v1749 = vand.u32 %v1748, 4294901760
    %1750 = vmatpush2.msra.mxu0 %v1749
    %1751 = vmatprep.subr.mxu0 0.0
    %v1752 = vand.u32 %v85, 4294901760
    %v1753 = vsub.f32 %v85, %v1752
    %v1754 = vand.u32 %v1753, 4294901760
    %1755 = vmatpush2.msra.mxu0 %v1754
    %1756 = vmatprep.subr.mxu0 0.0
    %v1757 = vand.u32 %v84, 4294901760
    %v1758 = vsub.f32 %v84, %v1757
    %v1759 = vand.u32 %v1758, 4294901760
    %1760 = vmatpush2.msra.mxu0 %v1759
    %1761 = vmatprep.subr.mxu0 0.0
    %v1762 = vand.u32 %v83, 4294901760
    %v1763 = vsub.f32 %v83, %v1762
    %v1764 = vand.u32 %v1763, 4294901760
    %1765 = vmatpush2.msra.mxu0 %v1764
    %1766 = vmatprep.subr.mxu0 0.0
    %v1767 = vand.u32 %v82, 4294901760
    %v1768 = vsub.f32 %v82, %v1767
    %v1769 = vand.u32 %v1768, 4294901760
    %1770 = vmatpush2.msra.mxu0 %v1769
    %1771 = vmatprep.subr.mxu0 0.0
    %v1772 = vand.u32 %v81, 4294901760
    %v1773 = vsub.f32 %v81, %v1772
    %v1774 = vand.u32 %v1773, 4294901760
    %1775 = vmatpush2.msra.mxu0 %v1774
    %1776 = vmatprep.subr.mxu0 0.0
    %v1777 = vand.u32 %v80, 4294901760
    %v1778 = vsub.f32 %v80, %v1777
    %v1779 = vand.u32 %v1778, 4294901760
    %1780 = vmatpush2.msra.mxu0 %v1779
    %1781 = vmatprep.subr.mxu0 0.0
    %v1782 = vand.u32 %v79, 4294901760
    %v1783 = vsub.f32 %v79, %v1782
    %v1784 = vand.u32 %v1783, 4294901760
    %1785 = vmatpush2.msra.mxu0 %v1784
    %1786 = vmatprep.subr.mxu0 0.0
    %v1787 = vand.u32 %v78, 4294901760
    %v1788 = vsub.f32 %v78, %v1787
    %v1789 = vand.u32 %v1788, 4294901760
    %1790 = vmatpush2.msra.mxu0 %v1789
    %1791 = vmatprep.subr.mxu0 0.0
    %v1792 = vand.u32 %v77, 4294901760
    %v1793 = vsub.f32 %v77, %v1792
    %v1794 = vand.u32 %v1793, 4294901760
    %1795 = vmatpush2.msra.mxu0 %v1794
    %1796 = vmatprep.subr.mxu0 0.0
    %v1797 = vand.u32 %v76, 4294901760
    %v1798 = vsub.f32 %v76, %v1797
    %v1799 = vand.u32 %v1798, 4294901760
    %1800 = vmatpush2.msra.mxu0 %v1799
    %v1801 = vand.u32 %v1038, 4294901760
    %1802 = vmatprep.mubr.f32.mxu0 %v1801
    %v1803 = vand.u32 %v1034, 4294901760
    %1804 = vmatmul.mubr.f32.gmra.mxu0 %v1803
    %v1805 = vpop.f32.mrf.mxu0
    %v1806 = vadd.f32 %v1638, %v1805
    %v1807 = vpop.f32.mrf.mxu0
    %1808 = vdwg.mxu0
    %1809 = vmatprep.subr.mxu0 0.0
    %v1810 = vand.u32 %v75, 4294901760
    %1811 = vmatpush1.msra.mxu0 %v1810
    %1812 = vmatprep.subr.mxu0 0.0
    %v1813 = vand.u32 %v74, 4294901760
    %1814 = vmatpush1.msra.mxu0 %v1813
    %1815 = vmatprep.subr.mxu0 0.0
    %v1816 = vand.u32 %v73, 4294901760
    %1817 = vmatpush1.msra.mxu0 %v1816
    %1818 = vmatprep.subr.mxu0 0.0
    %v1819 = vand.u32 %v72, 4294901760
    %1820 = vmatpush1.msra.mxu0 %v1819
    %1821 = vmatprep.subr.mxu0 0.0
    %v1822 = vand.u32 %v71, 4294901760
    %1823 = vmatpush1.msra.mxu0 %v1822
    %1824 = vmatprep.subr.mxu0 0.0
    %v1825 = vand.u32 %v70, 4294901760
    %1826 = vmatpush1.msra.mxu0 %v1825
    %1827 = vmatprep.subr.mxu0 0.0
    %v1828 = vand.u32 %v69, 4294901760
    %1829 = vmatpush1.msra.mxu0 %v1828
    %1830 = vmatprep.subr.mxu0 0.0
    %v1831 = vand.u32 %v68, 4294901760
    %1832 = vmatpush1.msra.mxu0 %v1831
    %1833 = vmatprep.subr.mxu0 0.0
    %v1834 = vand.u32 %v67, 4294901760
    %1835 = vmatpush1.msra.mxu0 %v1834
    %1836 = vmatprep.subr.mxu0 0.0
    %v1837 = vand.u32 %v66, 4294901760
    %1838 = vmatpush1.msra.mxu0 %v1837
    %1839 = vmatprep.subr.mxu0 0.0
    %v1840 = vand.u32 %v65, 4294901760
    %1841 = vmatpush1.msra.mxu0 %v1840
    %1842 = vmatprep.subr.mxu0 0.0
    %v1843 = vand.u32 %v64, 4294901760
    %1844 = vmatpush1.msra.mxu0 %v1843
    %1845 = vmatprep.subr.mxu0 0.0
    %v1846 = vand.u32 %v63, 4294901760
    %1847 = vmatpush1.msra.mxu0 %v1846
    %1848 = vmatprep.subr.mxu0 0.0
    %v1849 = vand.u32 %v62, 4294901760
    %1850 = vmatpush1.msra.mxu0 %v1849
    %1851 = vmatprep.subr.mxu0 0.0
    %v1852 = vand.u32 %v61, 4294901760
    %1853 = vmatpush1.msra.mxu0 %v1852
    %1854 = vmatprep.subr.mxu0 0.0
    %v1855 = vand.u32 %v60, 4294901760
    %1856 = vmatpush1.msra.mxu0 %v1855
    %1857 = vmatprep.subr.mxu0 0.0
    %v1858 = vand.u32 %v91, 4294901760
    %1859 = vmatpush2.msra.mxu0 %v1858
    %1860 = vmatprep.subr.mxu0 0.0
    %v1861 = vand.u32 %v90, 4294901760
    %1862 = vmatpush2.msra.mxu0 %v1861
    %1863 = vmatprep.subr.mxu0 0.0
    %v1864 = vand.u32 %v89, 4294901760
    %1865 = vmatpush2.msra.mxu0 %v1864
    %1866 = vmatprep.subr.mxu0 0.0
    %v1867 = vand.u32 %v88, 4294901760
    %1868 = vmatpush2.msra.mxu0 %v1867
    %1869 = vmatprep.subr.mxu0 0.0
    %v1870 = vand.u32 %v87, 4294901760
    %1871 = vmatpush2.msra.mxu0 %v1870
    %1872 = vmatprep.subr.mxu0 0.0
    %v1873 = vand.u32 %v86, 4294901760
    %1874 = vmatpush2.msra.mxu0 %v1873
    %1875 = vmatprep.subr.mxu0 0.0
    %v1876 = vand.u32 %v85, 4294901760
    %1877 = vmatpush2.msra.mxu0 %v1876
    %1878 = vmatprep.subr.mxu0 0.0
    %v1879 = vand.u32 %v84, 4294901760
    %1880 = vmatpush2.msra.mxu0 %v1879
    %1881 = vmatprep.subr.mxu0 0.0
    %v1882 = vand.u32 %v83, 4294901760
    %1883 = vmatpush2.msra.mxu0 %v1882
    %1884 = vmatprep.subr.mxu0 0.0
    %v1885 = vand.u32 %v82, 4294901760
    %1886 = vmatpush2.msra.mxu0 %v1885
    %1887 = vmatprep.subr.mxu0 0.0
    %v1888 = vand.u32 %v81, 4294901760
    %1889 = vmatpush2.msra.mxu0 %v1888
    %1890 = vmatprep.subr.mxu0 0.0
    %v1891 = vand.u32 %v80, 4294901760
    %1892 = vmatpush2.msra.mxu0 %v1891
    %1893 = vmatprep.subr.mxu0 0.0
    %v1894 = vand.u32 %v79, 4294901760
    %1895 = vmatpush2.msra.mxu0 %v1894
    %1896 = vmatprep.subr.mxu0 0.0
    %v1897 = vand.u32 %v78, 4294901760
    %1898 = vmatpush2.msra.mxu0 %v1897
    %1899 = vmatprep.subr.mxu0 0.0
    %v1900 = vand.u32 %v77, 4294901760
    %1901 = vmatpush2.msra.mxu0 %v1900
    %1902 = vmatprep.subr.mxu0 0.0
    %v1903 = vand.u32 %v76, 4294901760
    %1904 = vmatpush2.msra.mxu0 %v1903
    %v1905 = vand.u32 %v1038, 4294901760
    %1906 = vmatprep.mubr.f32.mxu0 %v1905
    %v1907 = vand.u32 %v1034, 4294901760
    %1908 = vmatmul.mubr.f32.gmra.mxu0 %v1907
    %v1909 = vpop.f32.mrf.mxu0
    %v1910 = vadd.f32 %v1806, %v1909
    %v1911 = vpop.f32.mrf.mxu0
    %1912 = vdwg.mxu0
    %1913 = vmatprep.subr.mxu0 0.0
    %v1914 = vand.u32 %v107, 4294901760
    %1915 = vmatpush1.msra.mxu0 %v1914
    %1916 = vmatprep.subr.mxu0 0.0
    %v1917 = vand.u32 %v106, 4294901760
    %1918 = vmatpush1.msra.mxu0 %v1917
    %1919 = vmatprep.subr.mxu0 0.0
    %v1920 = vand.u32 %v105, 4294901760
    %1921 = vmatpush1.msra.mxu0 %v1920
    %1922 = vmatprep.subr.mxu0 0.0
    %v1923 = vand.u32 %v104, 4294901760
    %1924 = vmatpush1.msra.mxu0 %v1923
    %1925 = vmatprep.subr.mxu0 0.0
    %v1926 = vand.u32 %v103, 4294901760
    %1927 = vmatpush1.msra.mxu0 %v1926
    %1928 = vmatprep.subr.mxu0 0.0
    %v1929 = vand.u32 %v102, 4294901760
    %1930 = vmatpush1.msra.mxu0 %v1929
    %1931 = vmatprep.subr.mxu0 0.0
    %v1932 = vand.u32 %v101, 4294901760
    %1933 = vmatpush1.msra.mxu0 %v1932
    %1934 = vmatprep.subr.mxu0 0.0
    %v1935 = vand.u32 %v100, 4294901760
    %1936 = vmatpush1.msra.mxu0 %v1935
    %1937 = vmatprep.subr.mxu0 0.0
    %v1938 = vand.u32 %v99, 4294901760
    %1939 = vmatpush1.msra.mxu0 %v1938
    %1940 = vmatprep.subr.mxu0 0.0
    %v1941 = vand.u32 %v98, 4294901760
    %1942 = vmatpush1.msra.mxu0 %v1941
    %1943 = vmatprep.subr.mxu0 0.0
    %v1944 = vand.u32 %v97, 4294901760
    %1945 = vmatpush1.msra.mxu0 %v1944
    %1946 = vmatprep.subr.mxu0 0.0
    %v1947 = vand.u32 %v96, 4294901760
    %1948 = vmatpush1.msra.mxu0 %v1947
    %1949 = vmatprep.subr.mxu0 0.0
    %v1950 = vand.u32 %v95, 4294901760
    %1951 = vmatpush1.msra.mxu0 %v1950
    %1952 = vmatprep.subr.mxu0 0.0
    %v1953 = vand.u32 %v94, 4294901760
    %1954 = vmatpush1.msra.mxu0 %v1953
    %1955 = vmatprep.subr.mxu0 0.0
    %v1956 = vand.u32 %v93, 4294901760
    %1957 = vmatpush1.msra.mxu0 %v1956
    %1958 = vmatprep.subr.mxu0 0.0
    %v1959 = vand.u32 %v92, 4294901760
    %1960 = vmatpush1.msra.mxu0 %v1959
    %1961 = vmatprep.subr.mxu0 0.0
    %v1962 = vand.u32 %v123, 4294901760
    %1963 = vmatpush2.msra.mxu0 %v1962
    %1964 = vmatprep.subr.mxu0 0.0
    %v1965 = vand.u32 %v122, 4294901760
    %1966 = vmatpush2.msra.mxu0 %v1965
    %1967 = vmatprep.subr.mxu0 0.0
    %v1968 = vand.u32 %v121, 4294901760
    %1969 = vmatpush2.msra.mxu0 %v1968
    %1970 = vmatprep.subr.mxu0 0.0
    %v1971 = vand.u32 %v120, 4294901760
    %1972 = vmatpush2.msra.mxu0 %v1971
    %1973 = vmatprep.subr.mxu0 0.0
    %v1974 = vand.u32 %v119, 4294901760
    %1975 = vmatpush2.msra.mxu0 %v1974
    %1976 = vmatprep.subr.mxu0 0.0
    %v1977 = vand.u32 %v118, 4294901760
    %1978 = vmatpush2.msra.mxu0 %v1977
    %1979 = vmatprep.subr.mxu0 0.0
    %v1980 = vand.u32 %v117, 4294901760
    %1981 = vmatpush2.msra.mxu0 %v1980
    %1982 = vmatprep.subr.mxu0 0.0
    %v1983 = vand.u32 %v116, 4294901760
    %1984 = vmatpush2.msra.mxu0 %v1983
    %1985 = vmatprep.subr.mxu0 0.0
    %v1986 = vand.u32 %v115, 4294901760
    %1987 = vmatpush2.msra.mxu0 %v1986
    %1988 = vmatprep.subr.mxu0 0.0
    %v1989 = vand.u32 %v114, 4294901760
    %1990 = vmatpush2.msra.mxu0 %v1989
    %1991 = vmatprep.subr.mxu0 0.0
    %v1992 = vand.u32 %v113, 4294901760
    %1993 = vmatpush2.msra.mxu0 %v1992
    %1994 = vmatprep.subr.mxu0 0.0
    %v1995 = vand.u32 %v112, 4294901760
    %1996 = vmatpush2.msra.mxu0 %v1995
    %1997 = vmatprep.subr.mxu0 0.0
    %v1998 = vand.u32 %v111, 4294901760
    %1999 = vmatpush2.msra.mxu0 %v1998
    %2000 = vmatprep.subr.mxu0 0.0
    %v2001 = vand.u32 %v110, 4294901760
    %2002 = vmatpush2.msra.mxu0 %v2001
    %2003 = vmatprep.subr.mxu0 0.0
    %v2004 = vand.u32 %v109, 4294901760
    %2005 = vmatpush2.msra.mxu0 %v2004
    %2006 = vmatprep.subr.mxu0 0.0
    %v2007 = vand.u32 %v108, 4294901760
    %2008 = vmatpush2.msra.mxu0 %v2007
    %v2009 = vand.u32 %v1046, 4294901760
    %v2010 = vsub.f32 %v1046, %v2009
    %v2011 = vand.u32 %v2010, 4294901760
    %v2012 = vsub.f32 %v2010, %v2011
    %v2013 = vand.u32 %v2012, 4294901760
    %2014 = vmatprep.mubr.f32.mxu0 %v2013
    %v2015 = vand.u32 %v1042, 4294901760
    %v2016 = vsub.f32 %v1042, %v2015
    %v2017 = vand.u32 %v2016, 4294901760
    %v2018 = vsub.f32 %v2016, %v2017
    %v2019 = vand.u32 %v2018, 4294901760
    %2020 = vmatmul.mubr.f32.gmra.mxu0 %v2019
    %v2021 = vpop.f32.mrf.mxu0
    %v2022 = vadd.f32 %v1910, %v2021
    %v2023 = vpop.f32.mrf.mxu0
    %2024 = vdwg.mxu0
    %2025 = vmatprep.subr.mxu0 0.0
    %v2026 = vand.u32 %v107, 4294901760
    %v2027 = vsub.f32 %v107, %v2026
    %v2028 = vand.u32 %v2027, 4294901760
    %v2029 = vsub.f32 %v2027, %v2028
    %v2030 = vand.u32 %v2029, 4294901760
    %2031 = vmatpush1.msra.mxu0 %v2030
    %2032 = vmatprep.subr.mxu0 0.0
    %v2033 = vand.u32 %v106, 4294901760
    %v2034 = vsub.f32 %v106, %v2033
    %v2035 = vand.u32 %v2034, 4294901760
    %v2036 = vsub.f32 %v2034, %v2035
    %v2037 = vand.u32 %v2036, 4294901760
    %2038 = vmatpush1.msra.mxu0 %v2037
    %2039 = vmatprep.subr.mxu0 0.0
    %v2040 = vand.u32 %v105, 4294901760
    %v2041 = vsub.f32 %v105, %v2040
    %v2042 = vand.u32 %v2041, 4294901760
    %v2043 = vsub.f32 %v2041, %v2042
    %v2044 = vand.u32 %v2043, 4294901760
    %2045 = vmatpush1.msra.mxu0 %v2044
    %2046 = vmatprep.subr.mxu0 0.0
    %v2047 = vand.u32 %v104, 4294901760
    %v2048 = vsub.f32 %v104, %v2047
    %v2049 = vand.u32 %v2048, 4294901760
    %v2050 = vsub.f32 %v2048, %v2049
    %v2051 = vand.u32 %v2050, 4294901760
    %2052 = vmatpush1.msra.mxu0 %v2051
    %2053 = vmatprep.subr.mxu0 0.0
    %v2054 = vand.u32 %v103, 4294901760
    %v2055 = vsub.f32 %v103, %v2054
    %v2056 = vand.u32 %v2055, 4294901760
    %v2057 = vsub.f32 %v2055, %v2056
    %v2058 = vand.u32 %v2057, 4294901760
    %2059 = vmatpush1.msra.mxu0 %v2058
    %2060 = vmatprep.subr.mxu0 0.0
    %v2061 = vand.u32 %v102, 4294901760
    %v2062 = vsub.f32 %v102, %v2061
    %v2063 = vand.u32 %v2062, 4294901760
    %v2064 = vsub.f32 %v2062, %v2063
    %v2065 = vand.u32 %v2064, 4294901760
    %2066 = vmatpush1.msra.mxu0 %v2065
    %2067 = vmatprep.subr.mxu0 0.0
    %v2068 = vand.u32 %v101, 4294901760
    %v2069 = vsub.f32 %v101, %v2068
    %v2070 = vand.u32 %v2069, 4294901760
    %v2071 = vsub.f32 %v2069, %v2070
    %v2072 = vand.u32 %v2071, 4294901760
    %2073 = vmatpush1.msra.mxu0 %v2072
    %2074 = vmatprep.subr.mxu0 0.0
    %v2075 = vand.u32 %v100, 4294901760
    %v2076 = vsub.f32 %v100, %v2075
    %v2077 = vand.u32 %v2076, 4294901760
    %v2078 = vsub.f32 %v2076, %v2077
    %v2079 = vand.u32 %v2078, 4294901760
    %2080 = vmatpush1.msra.mxu0 %v2079
    %2081 = vmatprep.subr.mxu0 0.0
    %v2082 = vand.u32 %v99, 4294901760
    %v2083 = vsub.f32 %v99, %v2082
    %v2084 = vand.u32 %v2083, 4294901760
    %v2085 = vsub.f32 %v2083, %v2084
    %v2086 = vand.u32 %v2085, 4294901760
    %2087 = vmatpush1.msra.mxu0 %v2086
    %2088 = vmatprep.subr.mxu0 0.0
    %v2089 = vand.u32 %v98, 4294901760
    %v2090 = vsub.f32 %v98, %v2089
    %v2091 = vand.u32 %v2090, 4294901760
    %v2092 = vsub.f32 %v2090, %v2091
    %v2093 = vand.u32 %v2092, 4294901760
    %2094 = vmatpush1.msra.mxu0 %v2093
    %2095 = vmatprep.subr.mxu0 0.0
    %v2096 = vand.u32 %v97, 4294901760
    %v2097 = vsub.f32 %v97, %v2096
    %v2098 = vand.u32 %v2097, 4294901760
    %v2099 = vsub.f32 %v2097, %v2098
    %v2100 = vand.u32 %v2099, 4294901760
    %2101 = vmatpush1.msra.mxu0 %v2100
    %2102 = vmatprep.subr.mxu0 0.0
    %v2103 = vand.u32 %v96, 4294901760
    %v2104 = vsub.f32 %v96, %v2103
    %v2105 = vand.u32 %v2104, 4294901760
    %v2106 = vsub.f32 %v2104, %v2105
    %v2107 = vand.u32 %v2106, 4294901760
    %2108 = vmatpush1.msra.mxu0 %v2107
    %2109 = vmatprep.subr.mxu0 0.0
    %v2110 = vand.u32 %v95, 4294901760
    %v2111 = vsub.f32 %v95, %v2110
    %v2112 = vand.u32 %v2111, 4294901760
    %v2113 = vsub.f32 %v2111, %v2112
    %v2114 = vand.u32 %v2113, 4294901760
    %2115 = vmatpush1.msra.mxu0 %v2114
    %2116 = vmatprep.subr.mxu0 0.0
    %v2117 = vand.u32 %v94, 4294901760
    %v2118 = vsub.f32 %v94, %v2117
    %v2119 = vand.u32 %v2118, 4294901760
    %v2120 = vsub.f32 %v2118, %v2119
    %v2121 = vand.u32 %v2120, 4294901760
    %2122 = vmatpush1.msra.mxu0 %v2121
    %2123 = vmatprep.subr.mxu0 0.0
    %v2124 = vand.u32 %v93, 4294901760
    %v2125 = vsub.f32 %v93, %v2124
    %v2126 = vand.u32 %v2125, 4294901760
    %v2127 = vsub.f32 %v2125, %v2126
    %v2128 = vand.u32 %v2127, 4294901760
    %2129 = vmatpush1.msra.mxu0 %v2128
    %2130 = vmatprep.subr.mxu0 0.0
    %v2131 = vand.u32 %v92, 4294901760
    %v2132 = vsub.f32 %v92, %v2131
    %v2133 = vand.u32 %v2132, 4294901760
    %v2134 = vsub.f32 %v2132, %v2133
    %v2135 = vand.u32 %v2134, 4294901760
    %2136 = vmatpush1.msra.mxu0 %v2135
    %2137 = vmatprep.subr.mxu0 0.0
    %v2138 = vand.u32 %v123, 4294901760
    %v2139 = vsub.f32 %v123, %v2138
    %v2140 = vand.u32 %v2139, 4294901760
    %v2141 = vsub.f32 %v2139, %v2140
    %v2142 = vand.u32 %v2141, 4294901760
    %2143 = vmatpush2.msra.mxu0 %v2142
    %2144 = vmatprep.subr.mxu0 0.0
    %v2145 = vand.u32 %v122, 4294901760
    %v2146 = vsub.f32 %v122, %v2145
    %v2147 = vand.u32 %v2146, 4294901760
    %v2148 = vsub.f32 %v2146, %v2147
    %v2149 = vand.u32 %v2148, 4294901760
    %2150 = vmatpush2.msra.mxu0 %v2149
    %2151 = vmatprep.subr.mxu0 0.0
    %v2152 = vand.u32 %v121, 4294901760
    %v2153 = vsub.f32 %v121, %v2152
    %v2154 = vand.u32 %v2153, 4294901760
    %v2155 = vsub.f32 %v2153, %v2154
    %v2156 = vand.u32 %v2155, 4294901760
    %2157 = vmatpush2.msra.mxu0 %v2156
    %2158 = vmatprep.subr.mxu0 0.0
    %v2159 = vand.u32 %v120, 4294901760
    %v2160 = vsub.f32 %v120, %v2159
    %v2161 = vand.u32 %v2160, 4294901760
    %v2162 = vsub.f32 %v2160, %v2161
    %v2163 = vand.u32 %v2162, 4294901760
    %2164 = vmatpush2.msra.mxu0 %v2163
    %2165 = vmatprep.subr.mxu0 0.0
    %v2166 = vand.u32 %v119, 4294901760
    %v2167 = vsub.f32 %v119, %v2166
    %v2168 = vand.u32 %v2167, 4294901760
    %v2169 = vsub.f32 %v2167, %v2168
    %v2170 = vand.u32 %v2169, 4294901760
    %2171 = vmatpush2.msra.mxu0 %v2170
    %2172 = vmatprep.subr.mxu0 0.0
    %v2173 = vand.u32 %v118, 4294901760
    %v2174 = vsub.f32 %v118, %v2173
    %v2175 = vand.u32 %v2174, 4294901760
    %v2176 = vsub.f32 %v2174, %v2175
    %v2177 = vand.u32 %v2176, 4294901760
    %2178 = vmatpush2.msra.mxu0 %v2177
    %2179 = vmatprep.subr.mxu0 0.0
    %v2180 = vand.u32 %v117, 4294901760
    %v2181 = vsub.f32 %v117, %v2180
    %v2182 = vand.u32 %v2181, 4294901760
    %v2183 = vsub.f32 %v2181, %v2182
    %v2184 = vand.u32 %v2183, 4294901760
    %2185 = vmatpush2.msra.mxu0 %v2184
    %2186 = vmatprep.subr.mxu0 0.0
    %v2187 = vand.u32 %v116, 4294901760
    %v2188 = vsub.f32 %v116, %v2187
    %v2189 = vand.u32 %v2188, 4294901760
    %v2190 = vsub.f32 %v2188, %v2189
    %v2191 = vand.u32 %v2190, 4294901760
    %2192 = vmatpush2.msra.mxu0 %v2191
    %2193 = vmatprep.subr.mxu0 0.0
    %v2194 = vand.u32 %v115, 4294901760
    %v2195 = vsub.f32 %v115, %v2194
    %v2196 = vand.u32 %v2195, 4294901760
    %v2197 = vsub.f32 %v2195, %v2196
    %v2198 = vand.u32 %v2197, 4294901760
    %2199 = vmatpush2.msra.mxu0 %v2198
    %2200 = vmatprep.subr.mxu0 0.0
    %v2201 = vand.u32 %v114, 4294901760
    %v2202 = vsub.f32 %v114, %v2201
    %v2203 = vand.u32 %v2202, 4294901760
    %v2204 = vsub.f32 %v2202, %v2203
    %v2205 = vand.u32 %v2204, 4294901760
    %2206 = vmatpush2.msra.mxu0 %v2205
    %2207 = vmatprep.subr.mxu0 0.0
    %v2208 = vand.u32 %v113, 4294901760
    %v2209 = vsub.f32 %v113, %v2208
    %v2210 = vand.u32 %v2209, 4294901760
    %v2211 = vsub.f32 %v2209, %v2210
    %v2212 = vand.u32 %v2211, 4294901760
    %2213 = vmatpush2.msra.mxu0 %v2212
    %2214 = vmatprep.subr.mxu0 0.0
    %v2215 = vand.u32 %v112, 4294901760
    %v2216 = vsub.f32 %v112, %v2215
    %v2217 = vand.u32 %v2216, 4294901760
    %v2218 = vsub.f32 %v2216, %v2217
    %v2219 = vand.u32 %v2218, 4294901760
    %2220 = vmatpush2.msra.mxu0 %v2219
    %2221 = vmatprep.subr.mxu0 0.0
    %v2222 = vand.u32 %v111, 4294901760
    %v2223 = vsub.f32 %v111, %v2222
    %v2224 = vand.u32 %v2223, 4294901760
    %v2225 = vsub.f32 %v2223, %v2224
    %v2226 = vand.u32 %v2225, 4294901760
    %2227 = vmatpush2.msra.mxu0 %v2226
    %2228 = vmatprep.subr.mxu0 0.0
    %v2229 = vand.u32 %v110, 4294901760
    %v2230 = vsub.f32 %v110, %v2229
    %v2231 = vand.u32 %v2230, 4294901760
    %v2232 = vsub.f32 %v2230, %v2231
    %v2233 = vand.u32 %v2232, 4294901760
    %2234 = vmatpush2.msra.mxu0 %v2233
    %2235 = vmatprep.subr.mxu0 0.0
    %v2236 = vand.u32 %v109, 4294901760
    %v2237 = vsub.f32 %v109, %v2236
    %v2238 = vand.u32 %v2237, 4294901760
    %v2239 = vsub.f32 %v2237, %v2238
    %v2240 = vand.u32 %v2239, 4294901760
    %2241 = vmatpush2.msra.mxu0 %v2240
    %2242 = vmatprep.subr.mxu0 0.0
    %v2243 = vand.u32 %v108, 4294901760
    %v2244 = vsub.f32 %v108, %v2243
    %v2245 = vand.u32 %v2244, 4294901760
    %v2246 = vsub.f32 %v2244, %v2245
    %v2247 = vand.u32 %v2246, 4294901760
    %2248 = vmatpush2.msra.mxu0 %v2247
    %v2249 = vand.u32 %v1046, 4294901760
    %2250 = vmatprep.mubr.f32.mxu0 %v2249
    %v2251 = vand.u32 %v1042, 4294901760
    %2252 = vmatmul.mubr.f32.gmra.mxu0 %v2251
    %v2253 = vpop.f32.mrf.mxu0
    %v2254 = vadd.f32 %v2022, %v2253
    %v2255 = vpop.f32.mrf.mxu0
    %2256 = vdwg.mxu0
    %2257 = vmatprep.subr.mxu0 0.0
    %v2258 = vand.u32 %v107, 4294901760
    %v2259 = vsub.f32 %v107, %v2258
    %2260 = vmatpush1.msra.mxu0 %v2259
    %2261 = vmatprep.subr.mxu0 0.0
    %v2262 = vand.u32 %v106, 4294901760
    %v2263 = vsub.f32 %v106, %v2262
    %2264 = vmatpush1.msra.mxu0 %v2263
    %2265 = vmatprep.subr.mxu0 0.0
    %v2266 = vand.u32 %v105, 4294901760
    %v2267 = vsub.f32 %v105, %v2266
    %2268 = vmatpush1.msra.mxu0 %v2267
    %2269 = vmatprep.subr.mxu0 0.0
    %v2270 = vand.u32 %v104, 4294901760
    %v2271 = vsub.f32 %v104, %v2270
    %2272 = vmatpush1.msra.mxu0 %v2271
    %2273 = vmatprep.subr.mxu0 0.0
    %v2274 = vand.u32 %v103, 4294901760
    %v2275 = vsub.f32 %v103, %v2274
    %2276 = vmatpush1.msra.mxu0 %v2275
    %2277 = vmatprep.subr.mxu0 0.0
    %v2278 = vand.u32 %v102, 4294901760
    %v2279 = vsub.f32 %v102, %v2278
    %2280 = vmatpush1.msra.mxu0 %v2279
    %2281 = vmatprep.subr.mxu0 0.0
    %v2282 = vand.u32 %v101, 4294901760
    %v2283 = vsub.f32 %v101, %v2282
    %2284 = vmatpush1.msra.mxu0 %v2283
    %2285 = vmatprep.subr.mxu0 0.0
    %v2286 = vand.u32 %v100, 4294901760
    %v2287 = vsub.f32 %v100, %v2286
    %2288 = vmatpush1.msra.mxu0 %v2287
    %2289 = vmatprep.subr.mxu0 0.0
    %v2290 = vand.u32 %v99, 4294901760
    %v2291 = vsub.f32 %v99, %v2290
    %2292 = vmatpush1.msra.mxu0 %v2291
    %2293 = vmatprep.subr.mxu0 0.0
    %v2294 = vand.u32 %v98, 4294901760
    %v2295 = vsub.f32 %v98, %v2294
    %2296 = vmatpush1.msra.mxu0 %v2295
    %2297 = vmatprep.subr.mxu0 0.0
    %v2298 = vand.u32 %v97, 4294901760
    %v2299 = vsub.f32 %v97, %v2298
    %2300 = vmatpush1.msra.mxu0 %v2299
    %2301 = vmatprep.subr.mxu0 0.0
    %v2302 = vand.u32 %v96, 4294901760
    %v2303 = vsub.f32 %v96, %v2302
    %2304 = vmatpush1.msra.mxu0 %v2303
    %2305 = vmatprep.subr.mxu0 0.0
    %v2306 = vand.u32 %v95, 4294901760
    %v2307 = vsub.f32 %v95, %v2306
    %2308 = vmatpush1.msra.mxu0 %v2307
    %2309 = vmatprep.subr.mxu0 0.0
    %v2310 = vand.u32 %v94, 4294901760
    %v2311 = vsub.f32 %v94, %v2310
    %2312 = vmatpush1.msra.mxu0 %v2311
    %2313 = vmatprep.subr.mxu0 0.0
    %v2314 = vand.u32 %v93, 4294901760
    %v2315 = vsub.f32 %v93, %v2314
    %2316 = vmatpush1.msra.mxu0 %v2315
    %2317 = vmatprep.subr.mxu0 0.0
    %v2318 = vand.u32 %v92, 4294901760
    %v2319 = vsub.f32 %v92, %v2318
    %2320 = vmatpush1.msra.mxu0 %v2319
    %2321 = vmatprep.subr.mxu0 0.0
    %v2322 = vand.u32 %v123, 4294901760
    %v2323 = vsub.f32 %v123, %v2322
    %2324 = vmatpush2.msra.mxu0 %v2323
    %2325 = vmatprep.subr.mxu0 0.0
    %v2326 = vand.u32 %v122, 4294901760
    %v2327 = vsub.f32 %v122, %v2326
    %2328 = vmatpush2.msra.mxu0 %v2327
    %2329 = vmatprep.subr.mxu0 0.0
    %v2330 = vand.u32 %v121, 4294901760
    %v2331 = vsub.f32 %v121, %v2330
    %2332 = vmatpush2.msra.mxu0 %v2331
    %2333 = vmatprep.subr.mxu0 0.0
    %v2334 = vand.u32 %v120, 4294901760
    %v2335 = vsub.f32 %v120, %v2334
    %2336 = vmatpush2.msra.mxu0 %v2335
    %2337 = vmatprep.subr.mxu0 0.0
    %v2338 = vand.u32 %v119, 4294901760
    %v2339 = vsub.f32 %v119, %v2338
    %2340 = vmatpush2.msra.mxu0 %v2339
    %2341 = vmatprep.subr.mxu0 0.0
    %v2342 = vand.u32 %v118, 4294901760
    %v2343 = vsub.f32 %v118, %v2342
    %2344 = vmatpush2.msra.mxu0 %v2343
    %2345 = vmatprep.subr.mxu0 0.0
    %v2346 = vand.u32 %v117, 4294901760
    %v2347 = vsub.f32 %v117, %v2346
    %2348 = vmatpush2.msra.mxu0 %v2347
    %2349 = vmatprep.subr.mxu0 0.0
    %v2350 = vand.u32 %v116, 4294901760
    %v2351 = vsub.f32 %v116, %v2350
    %2352 = vmatpush2.msra.mxu0 %v2351
    %2353 = vmatprep.subr.mxu0 0.0
    %v2354 = vand.u32 %v115, 4294901760
    %v2355 = vsub.f32 %v115, %v2354
    %2356 = vmatpush2.msra.mxu0 %v2355
    %2357 = vmatprep.subr.mxu0 0.0
    %v2358 = vand.u32 %v114, 4294901760
    %v2359 = vsub.f32 %v114, %v2358
    %2360 = vmatpush2.msra.mxu0 %v2359
    %2361 = vmatprep.subr.mxu0 0.0
    %v2362 = vand.u32 %v113, 4294901760
    %v2363 = vsub.f32 %v113, %v2362
    %2364 = vmatpush2.msra.mxu0 %v2363
    %2365 = vmatprep.subr.mxu0 0.0
    %v2366 = vand.u32 %v112, 4294901760
    %v2367 = vsub.f32 %v112, %v2366
    %2368 = vmatpush2.msra.mxu0 %v2367
    %2369 = vmatprep.subr.mxu0 0.0
    %v2370 = vand.u32 %v111, 4294901760
    %v2371 = vsub.f32 %v111, %v2370
    %2372 = vmatpush2.msra.mxu0 %v2371
    %2373 = vmatprep.subr.mxu0 0.0
    %v2374 = vand.u32 %v110, 4294901760
    %v2375 = vsub.f32 %v110, %v2374
    %2376 = vmatpush2.msra.mxu0 %v2375
    %2377 = vmatprep.subr.mxu0 0.0
    %v2378 = vand.u32 %v109, 4294901760
    %v2379 = vsub.f32 %v109, %v2378
    %2380 = vmatpush2.msra.mxu0 %v2379
    %2381 = vmatprep.subr.mxu0 0.0
    %v2382 = vand.u32 %v108, 4294901760
    %v2383 = vsub.f32 %v108, %v2382
    %2384 = vmatpush2.msra.mxu0 %v2383
    %v2385 = vand.u32 %v1046, 4294901760
    %v2386 = vsub.f32 %v1046, %v2385
    %2387 = vmatprep.mubr.f32.mxu0 %v2386
    %v2388 = vand.u32 %v1042, 4294901760
    %v2389 = vsub.f32 %v1042, %v2388
    %2390 = vmatmul.mubr.f32.gmra.mxu0 %v2389
    %v2391 = vpop.f32.mrf.mxu0
    %v2392 = vadd.f32 %v2254, %v2391
    %v2393 = vpop.f32.mrf.mxu0
    %2394 = vdwg.mxu0
    %2395 = vmatprep.subr.mxu0 0.0
    %v2396 = vand.u32 %v107, 4294901760
    %2397 = vmatpush1.msra.mxu0 %v2396
    %2398 = vmatprep.subr.mxu0 0.0
    %v2399 = vand.u32 %v106, 4294901760
    %2400 = vmatpush1.msra.mxu0 %v2399
    %2401 = vmatprep.subr.mxu0 0.0
    %v2402 = vand.u32 %v105, 4294901760
    %2403 = vmatpush1.msra.mxu0 %v2402
    %2404 = vmatprep.subr.mxu0 0.0
    %v2405 = vand.u32 %v104, 4294901760
    %2406 = vmatpush1.msra.mxu0 %v2405
    %2407 = vmatprep.subr.mxu0 0.0
    %v2408 = vand.u32 %v103, 4294901760
    %2409 = vmatpush1.msra.mxu0 %v2408
    %2410 = vmatprep.subr.mxu0 0.0
    %v2411 = vand.u32 %v102, 4294901760
    %2412 = vmatpush1.msra.mxu0 %v2411
    %2413 = vmatprep.subr.mxu0 0.0
    %v2414 = vand.u32 %v101, 4294901760
    %2415 = vmatpush1.msra.mxu0 %v2414
    %2416 = vmatprep.subr.mxu0 0.0
    %v2417 = vand.u32 %v100, 4294901760
    %2418 = vmatpush1.msra.mxu0 %v2417
    %2419 = vmatprep.subr.mxu0 0.0
    %v2420 = vand.u32 %v99, 4294901760
    %2421 = vmatpush1.msra.mxu0 %v2420
    %2422 = vmatprep.subr.mxu0 0.0
    %v2423 = vand.u32 %v98, 4294901760
    %2424 = vmatpush1.msra.mxu0 %v2423
    %2425 = vmatprep.subr.mxu0 0.0
    %v2426 = vand.u32 %v97, 4294901760
    %2427 = vmatpush1.msra.mxu0 %v2426
    %2428 = vmatprep.subr.mxu0 0.0
    %v2429 = vand.u32 %v96, 4294901760
    %2430 = vmatpush1.msra.mxu0 %v2429
    %2431 = vmatprep.subr.mxu0 0.0
    %v2432 = vand.u32 %v95, 4294901760
    %2433 = vmatpush1.msra.mxu0 %v2432
    %2434 = vmatprep.subr.mxu0 0.0
    %v2435 = vand.u32 %v94, 4294901760
    %2436 = vmatpush1.msra.mxu0 %v2435
    %2437 = vmatprep.subr.mxu0 0.0
    %v2438 = vand.u32 %v93, 4294901760
    %2439 = vmatpush1.msra.mxu0 %v2438
    %2440 = vmatprep.subr.mxu0 0.0
    %v2441 = vand.u32 %v92, 4294901760
    %2442 = vmatpush1.msra.mxu0 %v2441
    %2443 = vmatprep.subr.mxu0 0.0
    %v2444 = vand.u32 %v123, 4294901760
    %2445 = vmatpush2.msra.mxu0 %v2444
    %2446 = vmatprep.subr.mxu0 0.0
    %v2447 = vand.u32 %v122, 4294901760
    %2448 = vmatpush2.msra.mxu0 %v2447
    %2449 = vmatprep.subr.mxu0 0.0
    %v2450 = vand.u32 %v121, 4294901760
    %2451 = vmatpush2.msra.mxu0 %v2450
    %2452 = vmatprep.subr.mxu0 0.0
    %v2453 = vand.u32 %v120, 4294901760
    %2454 = vmatpush2.msra.mxu0 %v2453
    %2455 = vmatprep.subr.mxu0 0.0
    %v2456 = vand.u32 %v119, 4294901760
    %2457 = vmatpush2.msra.mxu0 %v2456
    %2458 = vmatprep.subr.mxu0 0.0
    %v2459 = vand.u32 %v118, 4294901760
    %2460 = vmatpush2.msra.mxu0 %v2459
    %2461 = vmatprep.subr.mxu0 0.0
    %v2462 = vand.u32 %v117, 4294901760
    %2463 = vmatpush2.msra.mxu0 %v2462
    %2464 = vmatprep.subr.mxu0 0.0
    %v2465 = vand.u32 %v116, 4294901760
    %2466 = vmatpush2.msra.mxu0 %v2465
    %2467 = vmatprep.subr.mxu0 0.0
    %v2468 = vand.u32 %v115, 4294901760
    %2469 = vmatpush2.msra.mxu0 %v2468
    %2470 = vmatprep.subr.mxu0 0.0
    %v2471 = vand.u32 %v114, 4294901760
    %2472 = vmatpush2.msra.mxu0 %v2471
    %2473 = vmatprep.subr.mxu0 0.0
    %v2474 = vand.u32 %v113, 4294901760
    %2475 = vmatpush2.msra.mxu0 %v2474
    %2476 = vmatprep.subr.mxu0 0.0
    %v2477 = vand.u32 %v112, 4294901760
    %2478 = vmatpush2.msra.mxu0 %v2477
    %2479 = vmatprep.subr.mxu0 0.0
    %v2480 = vand.u32 %v111, 4294901760
    %2481 = vmatpush2.msra.mxu0 %v2480
    %2482 = vmatprep.subr.mxu0 0.0
    %v2483 = vand.u32 %v110, 4294901760
    %2484 = vmatpush2.msra.mxu0 %v2483
    %2485 = vmatprep.subr.mxu0 0.0
    %v2486 = vand.u32 %v109, 4294901760
    %2487 = vmatpush2.msra.mxu0 %v2486
    %2488 = vmatprep.subr.mxu0 0.0
    %v2489 = vand.u32 %v108, 4294901760
    %2490 = vmatpush2.msra.mxu0 %v2489
    %v2491 = vand.u32 %v1046, 4294901760
    %v2492 = vsub.f32 %v1046, %v2491
    %v2493 = vand.u32 %v2492, 4294901760
    %2494 = vmatprep.mubr.f32.mxu0 %v2493
    %v2495 = vand.u32 %v1042, 4294901760
    %v2496 = vsub.f32 %v1042, %v2495
    %v2497 = vand.u32 %v2496, 4294901760
    %2498 = vmatmul.mubr.f32.gmra.mxu0 %v2497
    %v2499 = vpop.f32.mrf.mxu0
    %v2500 = vadd.f32 %v2392, %v2499
    %v2501 = vpop.f32.mrf.mxu0
    %2502 = vdwg.mxu0
    %2503 = vmatprep.subr.mxu0 0.0
    %v2504 = vand.u32 %v107, 4294901760
    %v2505 = vsub.f32 %v107, %v2504
    %v2506 = vand.u32 %v2505, 4294901760
    %2507 = vmatpush1.msra.mxu0 %v2506
    %2508 = vmatprep.subr.mxu0 0.0
    %v2509 = vand.u32 %v106, 4294901760
    %v2510 = vsub.f32 %v106, %v2509
    %v2511 = vand.u32 %v2510, 4294901760
    %2512 = vmatpush1.msra.mxu0 %v2511
    %2513 = vmatprep.subr.mxu0 0.0
    %v2514 = vand.u32 %v105, 4294901760
    %v2515 = vsub.f32 %v105, %v2514
    %v2516 = vand.u32 %v2515, 4294901760
    %2517 = vmatpush1.msra.mxu0 %v2516
    %2518 = vmatprep.subr.mxu0 0.0
    %v2519 = vand.u32 %v104, 4294901760
    %v2520 = vsub.f32 %v104, %v2519
    %v2521 = vand.u32 %v2520, 4294901760
    %2522 = vmatpush1.msra.mxu0 %v2521
    %2523 = vmatprep.subr.mxu0 0.0
    %v2524 = vand.u32 %v103, 4294901760
    %v2525 = vsub.f32 %v103, %v2524
    %v2526 = vand.u32 %v2525, 4294901760
    %2527 = vmatpush1.msra.mxu0 %v2526
    %2528 = vmatprep.subr.mxu0 0.0
    %v2529 = vand.u32 %v102, 4294901760
    %v2530 = vsub.f32 %v102, %v2529
    %v2531 = vand.u32 %v2530, 4294901760
    %2532 = vmatpush1.msra.mxu0 %v2531
    %2533 = vmatprep.subr.mxu0 0.0
    %v2534 = vand.u32 %v101, 4294901760
    %v2535 = vsub.f32 %v101, %v2534
    %v2536 = vand.u32 %v2535, 4294901760
    %2537 = vmatpush1.msra.mxu0 %v2536
    %2538 = vmatprep.subr.mxu0 0.0
    %v2539 = vand.u32 %v100, 4294901760
    %v2540 = vsub.f32 %v100, %v2539
    %v2541 = vand.u32 %v2540, 4294901760
    %2542 = vmatpush1.msra.mxu0 %v2541
    %2543 = vmatprep.subr.mxu0 0.0
    %v2544 = vand.u32 %v99, 4294901760
    %v2545 = vsub.f32 %v99, %v2544
    %v2546 = vand.u32 %v2545, 4294901760
    %2547 = vmatpush1.msra.mxu0 %v2546
    %2548 = vmatprep.subr.mxu0 0.0
    %v2549 = vand.u32 %v98, 4294901760
    %v2550 = vsub.f32 %v98, %v2549
    %v2551 = vand.u32 %v2550, 4294901760
    %2552 = vmatpush1.msra.mxu0 %v2551
    %2553 = vmatprep.subr.mxu0 0.0
    %v2554 = vand.u32 %v97, 4294901760
    %v2555 = vsub.f32 %v97, %v2554
    %v2556 = vand.u32 %v2555, 4294901760
    %2557 = vmatpush1.msra.mxu0 %v2556
    %2558 = vmatprep.subr.mxu0 0.0
    %v2559 = vand.u32 %v96, 4294901760
    %v2560 = vsub.f32 %v96, %v2559
    %v2561 = vand.u32 %v2560, 4294901760
    %2562 = vmatpush1.msra.mxu0 %v2561
    %2563 = vmatprep.subr.mxu0 0.0
    %v2564 = vand.u32 %v95, 4294901760
    %v2565 = vsub.f32 %v95, %v2564
    %v2566 = vand.u32 %v2565, 4294901760
    %2567 = vmatpush1.msra.mxu0 %v2566
    %2568 = vmatprep.subr.mxu0 0.0
    %v2569 = vand.u32 %v94, 4294901760
    %v2570 = vsub.f32 %v94, %v2569
    %v2571 = vand.u32 %v2570, 4294901760
    %2572 = vmatpush1.msra.mxu0 %v2571
    %2573 = vmatprep.subr.mxu0 0.0
    %v2574 = vand.u32 %v93, 4294901760
    %v2575 = vsub.f32 %v93, %v2574
    %v2576 = vand.u32 %v2575, 4294901760
    %2577 = vmatpush1.msra.mxu0 %v2576
    %2578 = vmatprep.subr.mxu0 0.0
    %v2579 = vand.u32 %v92, 4294901760
    %v2580 = vsub.f32 %v92, %v2579
    %v2581 = vand.u32 %v2580, 4294901760
    %2582 = vmatpush1.msra.mxu0 %v2581
    %2583 = vmatprep.subr.mxu0 0.0
    %v2584 = vand.u32 %v123, 4294901760
    %v2585 = vsub.f32 %v123, %v2584
    %v2586 = vand.u32 %v2585, 4294901760
    %2587 = vmatpush2.msra.mxu0 %v2586
    %2588 = vmatprep.subr.mxu0 0.0
    %v2589 = vand.u32 %v122, 4294901760
    %v2590 = vsub.f32 %v122, %v2589
    %v2591 = vand.u32 %v2590, 4294901760
    %2592 = vmatpush2.msra.mxu0 %v2591
    %2593 = vmatprep.subr.mxu0 0.0
    %v2594 = vand.u32 %v121, 4294901760
    %v2595 = vsub.f32 %v121, %v2594
    %v2596 = vand.u32 %v2595, 4294901760
    %2597 = vmatpush2.msra.mxu0 %v2596
    %2598 = vmatprep.subr.mxu0 0.0
    %v2599 = vand.u32 %v120, 4294901760
    %v2600 = vsub.f32 %v120, %v2599
    %v2601 = vand.u32 %v2600, 4294901760
    %2602 = vmatpush2.msra.mxu0 %v2601
    %2603 = vmatprep.subr.mxu0 0.0
    %v2604 = vand.u32 %v119, 4294901760
    %v2605 = vsub.f32 %v119, %v2604
    %v2606 = vand.u32 %v2605, 4294901760
    %2607 = vmatpush2.msra.mxu0 %v2606
    %2608 = vmatprep.subr.mxu0 0.0
    %v2609 = vand.u32 %v118, 4294901760
    %v2610 = vsub.f32 %v118, %v2609
    %v2611 = vand.u32 %v2610, 4294901760
    %2612 = vmatpush2.msra.mxu0 %v2611
    %2613 = vmatprep.subr.mxu0 0.0
    %v2614 = vand.u32 %v117, 4294901760
    %v2615 = vsub.f32 %v117, %v2614
    %v2616 = vand.u32 %v2615, 4294901760
    %2617 = vmatpush2.msra.mxu0 %v2616
    %2618 = vmatprep.subr.mxu0 0.0
    %v2619 = vand.u32 %v116, 4294901760
    %v2620 = vsub.f32 %v116, %v2619
    %v2621 = vand.u32 %v2620, 4294901760
    %2622 = vmatpush2.msra.mxu0 %v2621
    %2623 = vmatprep.subr.mxu0 0.0
    %v2624 = vand.u32 %v115, 4294901760
    %v2625 = vsub.f32 %v115, %v2624
    %v2626 = vand.u32 %v2625, 4294901760
    %2627 = vmatpush2.msra.mxu0 %v2626
    %2628 = vmatprep.subr.mxu0 0.0
    %v2629 = vand.u32 %v114, 4294901760
    %v2630 = vsub.f32 %v114, %v2629
    %v2631 = vand.u32 %v2630, 4294901760
    %2632 = vmatpush2.msra.mxu0 %v2631
    %2633 = vmatprep.subr.mxu0 0.0
    %v2634 = vand.u32 %v113, 4294901760
    %v2635 = vsub.f32 %v113, %v2634
    %v2636 = vand.u32 %v2635, 4294901760
    %2637 = vmatpush2.msra.mxu0 %v2636
    %2638 = vmatprep.subr.mxu0 0.0
    %v2639 = vand.u32 %v112, 4294901760
    %v2640 = vsub.f32 %v112, %v2639
    %v2641 = vand.u32 %v2640, 4294901760
    %2642 = vmatpush2.msra.mxu0 %v2641
    %2643 = vmatprep.subr.mxu0 0.0
    %v2644 = vand.u32 %v111, 4294901760
    %v2645 = vsub.f32 %v111, %v2644
    %v2646 = vand.u32 %v2645, 4294901760
    %2647 = vmatpush2.msra.mxu0 %v2646
    %2648 = vmatprep.subr.mxu0 0.0
    %v2649 = vand.u32 %v110, 4294901760
    %v2650 = vsub.f32 %v110, %v2649
    %v2651 = vand.u32 %v2650, 4294901760
    %2652 = vmatpush2.msra.mxu0 %v2651
    %2653 = vmatprep.subr.mxu0 0.0
    %v2654 = vand.u32 %v109, 4294901760
    %v2655 = vsub.f32 %v109, %v2654
    %v2656 = vand.u32 %v2655, 4294901760
    %2657 = vmatpush2.msra.mxu0 %v2656
    %2658 = vmatprep.subr.mxu0 0.0
    %v2659 = vand.u32 %v108, 4294901760
    %v2660 = vsub.f32 %v108, %v2659
    %v2661 = vand.u32 %v2660, 4294901760
    %2662 = vmatpush2.msra.mxu0 %v2661
    %v2663 = vand.u32 %v1046, 4294901760
    %2664 = vmatprep.mubr.f32.mxu0 %v2663
    %v2665 = vand.u32 %v1042, 4294901760
    %2666 = vmatmul.mubr.f32.gmra.mxu0 %v2665
    %v2667 = vpop.f32.mrf.mxu0
    %v2668 = vadd.f32 %v2500, %v2667
    %v2669 = vpop.f32.mrf.mxu0
    %2670 = vdwg.mxu0
    %2671 = vmatprep.subr.mxu0 0.0
    %v2672 = vand.u32 %v107, 4294901760
    %2673 = vmatpush1.msra.mxu0 %v2672
    %2674 = vmatprep.subr.mxu0 0.0
    %v2675 = vand.u32 %v106, 4294901760
    %2676 = vmatpush1.msra.mxu0 %v2675
    %2677 = vmatprep.subr.mxu0 0.0
    %v2678 = vand.u32 %v105, 4294901760
    %2679 = vmatpush1.msra.mxu0 %v2678
    %2680 = vmatprep.subr.mxu0 0.0
    %v2681 = vand.u32 %v104, 4294901760
    %2682 = vmatpush1.msra.mxu0 %v2681
    %2683 = vmatprep.subr.mxu0 0.0
    %v2684 = vand.u32 %v103, 4294901760
    %2685 = vmatpush1.msra.mxu0 %v2684
    %2686 = vmatprep.subr.mxu0 0.0
    %v2687 = vand.u32 %v102, 4294901760
    %2688 = vmatpush1.msra.mxu0 %v2687
    %2689 = vmatprep.subr.mxu0 0.0
    %v2690 = vand.u32 %v101, 4294901760
    %2691 = vmatpush1.msra.mxu0 %v2690
    %2692 = vmatprep.subr.mxu0 0.0
    %v2693 = vand.u32 %v100, 4294901760
    %2694 = vmatpush1.msra.mxu0 %v2693
    %2695 = vmatprep.subr.mxu0 0.0
    %v2696 = vand.u32 %v99, 4294901760
    %2697 = vmatpush1.msra.mxu0 %v2696
    %2698 = vmatprep.subr.mxu0 0.0
    %v2699 = vand.u32 %v98, 4294901760
    %2700 = vmatpush1.msra.mxu0 %v2699
    %2701 = vmatprep.subr.mxu0 0.0
    %v2702 = vand.u32 %v97, 4294901760
    %2703 = vmatpush1.msra.mxu0 %v2702
    %2704 = vmatprep.subr.mxu0 0.0
    %v2705 = vand.u32 %v96, 4294901760
    %2706 = vmatpush1.msra.mxu0 %v2705
    %2707 = vmatprep.subr.mxu0 0.0
    %v2708 = vand.u32 %v95, 4294901760
    %2709 = vmatpush1.msra.mxu0 %v2708
    %2710 = vmatprep.subr.mxu0 0.0
    %v2711 = vand.u32 %v94, 4294901760
    %2712 = vmatpush1.msra.mxu0 %v2711
    %2713 = vmatprep.subr.mxu0 0.0
    %v2714 = vand.u32 %v93, 4294901760
    %2715 = vmatpush1.msra.mxu0 %v2714
    %2716 = vmatprep.subr.mxu0 0.0
    %v2717 = vand.u32 %v92, 4294901760
    %2718 = vmatpush1.msra.mxu0 %v2717
    %2719 = vmatprep.subr.mxu0 0.0
    %v2720 = vand.u32 %v123, 4294901760
    %2721 = vmatpush2.msra.mxu0 %v2720
    %2722 = vmatprep.subr.mxu0 0.0
    %v2723 = vand.u32 %v122, 4294901760
    %2724 = vmatpush2.msra.mxu0 %v2723
    %2725 = vmatprep.subr.mxu0 0.0
    %v2726 = vand.u32 %v121, 4294901760
    %2727 = vmatpush2.msra.mxu0 %v2726
    %2728 = vmatprep.subr.mxu0 0.0
    %v2729 = vand.u32 %v120, 4294901760
    %2730 = vmatpush2.msra.mxu0 %v2729
    %2731 = vmatprep.subr.mxu0 0.0
    %v2732 = vand.u32 %v119, 4294901760
    %2733 = vmatpush2.msra.mxu0 %v2732
    %2734 = vmatprep.subr.mxu0 0.0
    %v2735 = vand.u32 %v118, 4294901760
    %2736 = vmatpush2.msra.mxu0 %v2735
    %2737 = vmatprep.subr.mxu0 0.0
    %v2738 = vand.u32 %v117, 4294901760
    %2739 = vmatpush2.msra.mxu0 %v2738
    %2740 = vmatprep.subr.mxu0 0.0
    %v2741 = vand.u32 %v116, 4294901760
    %2742 = vmatpush2.msra.mxu0 %v2741
    %2743 = vmatprep.subr.mxu0 0.0
    %v2744 = vand.u32 %v115, 4294901760
    %2745 = vmatpush2.msra.mxu0 %v2744
    %2746 = vmatprep.subr.mxu0 0.0
    %v2747 = vand.u32 %v114, 4294901760
    %2748 = vmatpush2.msra.mxu0 %v2747
    %2749 = vmatprep.subr.mxu0 0.0
    %v2750 = vand.u32 %v113, 4294901760
    %2751 = vmatpush2.msra.mxu0 %v2750
    %2752 = vmatprep.subr.mxu0 0.0
    %v2753 = vand.u32 %v112, 4294901760
    %2754 = vmatpush2.msra.mxu0 %v2753
    %2755 = vmatprep.subr.mxu0 0.0
    %v2756 = vand.u32 %v111, 4294901760
    %2757 = vmatpush2.msra.mxu0 %v2756
    %2758 = vmatprep.subr.mxu0 0.0
    %v2759 = vand.u32 %v110, 4294901760
    %2760 = vmatpush2.msra.mxu0 %v2759
    %2761 = vmatprep.subr.mxu0 0.0
    %v2762 = vand.u32 %v109, 4294901760
    %2763 = vmatpush2.msra.mxu0 %v2762
    %2764 = vmatprep.subr.mxu0 0.0
    %v2765 = vand.u32 %v108, 4294901760
    %2766 = vmatpush2.msra.mxu0 %v2765
    %v2767 = vand.u32 %v1046, 4294901760
    %2768 = vmatprep.mubr.f32.mxu0 %v2767
    %v2769 = vand.u32 %v1042, 4294901760
    %2770 = vmatmul.mubr.f32.gmra.mxu0 %v2769
    %v2771 = vpop.f32.mrf.mxu0
    %v2772 = vadd.f32 %v2668, %v2771
    %v2773 = vpop.f32.mrf.mxu0
    %2774 = vdwg.mxu0
    %2775 = vst [vmem:[#allocation8] sm:$0x1] %v2772
    // Predicated region
    $region30: #{tpu_custom_call.1} parent=1 // pred_check
      _
    $region31: #{tpu_custom_call.1} parent=1 // pred_check_branch
      %2777 = sbr.rel (0) target = $region33
    $region32: #{tpu_custom_call.1} parent=1 // pred_region
      %s2779 = ssub.s32 16, 16
      %2780 = vsyncadd [#allocation4], %s2779
      %s2782 = sshll.u32 [#allocation8], 4
      %s2783 = int_to_ptr.vmem [resolvable:$true] %s2782
      %2785 = dma.vmem_to_hbm [thread:$0]  %s2783, 16, %s4, [#allocation4]
    $region33: #{tpu_custom_call.1} parent=1 // pred_fallthru
      _
    // Predicated region
    $region34: #{tpu_custom_call.1} parent=1 // pred_check
      _
    $region35: #{tpu_custom_call.1} parent=1 // pred_check_branch
      %2787 = sbr.rel (0) target = $region37
    $region36: #{tpu_custom_call.1} parent=1 // pred_region
      %2788 = dma.done [#allocation4], 16
    $region37: #{tpu_custom_call.1} parent=1 // pred_fallthru
      _
    %2789 = vsyncpa [#allocation3], 1
    %2790 = vsyncpa [#allocation6], 1
    %2791 = vsyncpa [#allocation4], 1

</llo_original>
